<compile_context>
chip_gen: v5e
topology: v5e:2x2
jax: 0.10.0
libtpu: 0.0.40
codegen_flags: <defaults>
</compile_context>

<pallas_src>
import functools

import jax
import jax.numpy as jnp
from jax.experimental import pallas as pl
from jax.experimental.pallas import tpu as pltpu


def _round_up(x, m):
    return ((x + m - 1) // m) * m


@functools.lru_cache(maxsize=1)
def _tpu_device_kind():
    try:
        return jax.devices()[0].device_kind.lower()
    except Exception:
        return ""


def _critic_kernel(x_ref, w1_ref, w2_ref, b2_ref, w3_ref, b3_ref, out_ref):
    """One batch tile.  x_ref: (D+1, tb) with a trailing ones row (fc1 bias folded).

    Dtypes are decided by the wrapper (cast ONCE, outside the kernel):
      * x/w1/w2/w3 dtype = MXU operand dtype (bf16 by default, f32 optional)
      * b2 dtype         = epilogue/activation dtype (bf16 on v6e/v7x, f32 on v5e)
    so no per-grid-step weight casts run on the VPU.
    """
    act_dtype = b2_ref.dtype
    mxu_dtype = w2_ref.dtype

    # fc1 (+ folded bias) + ReLU: (F1, D+1) @ (D+1, tb) -> (F1, tb), f32 accumulation.
    h1 = jnp.dot(w1_ref[...], x_ref[...], preferred_element_type=jnp.float32)
    h1 = jnp.maximum(h1.astype(act_dtype), 0.0)

    # fc2 + bias + ReLU: (F2, F1) @ (F1, tb) -> (F2, tb).
    h2 = jnp.dot(w2_ref[...], h1.astype(mxu_dtype), preferred_element_type=jnp.float32)
    h2 = jnp.maximum(h2.astype(act_dtype) + b2_ref[...], 0.0)

    # fc3 on the MXU: (1, F2) @ (F2, tb) -> (1, tb); lane-dense output row.
    v = jnp.dot(w3_ref[...], h2.astype(w3_ref.dtype), preferred_element_type=jnp.float32)
    out_ref[...] = (v + b3_ref[...]).astype(out_ref.dtype)


def critic_forward(state, params, *, batch_tile=None, use_bf16=True, epilogue_bf16=None):
    """Pallas implementation of CriticNetwork.forward.

    state : (B, input_dim) float32
    params: dict with w1 (D,F1), b1 (1,F1), w2 (F1,F2), b2 (1,F2), w3 (F2,1), b3 (1,1)
    returns: (B, 1) float32

    use_bf16      : bf16 MXU operands (f32 accumulation); casts happen once in the
                    wrapper, never per grid step.  Slightly reduced input precision.
    epilogue_bf16 : bias+ReLU in bf16.  Defaults to True on v6e/v7x (packed bf16
                    VALU), False on v5e (no bf16 VPU).
    """
    B, D = state.shape
    F1 = params["w1"].shape[1]
    F2 = params["w2"].shape[1]

    kind = _tpu_device_kind()
    is_v5 = "v5" in kind
    if batch_tile is None:
        # v5e: slower MXU + 1 vst slot -> compute already dwarfs grid overhead at 1024.
        # v6e/v7x: larger tiles amortize the ~0.35us per-grid-step overhead.
        batch_tile = 1024 if is_v5 else 2048
    if epilogue_bf16 is None:
        epilogue_bf16 = not is_v5
    mxu_dtype = jnp.bfloat16 if use_bf16 else jnp.float32
    act_dtype = jnp.bfloat16 if (use_bf16 and epilogue_bf16) else jnp.float32

    # --- batch tiling --------------------------------------------------------
    B8 = _round_up(B, 8)
    if B8 <= 256:
        tb = B8                                   # tiny batch: one tile covers it
    elif B8 <= 2 * batch_tile:
        tb = _round_up(pl.cdiv(B8, 2), 128)       # >=2 tiles keep both v7x TCs busy
    else:
        tb = _round_up(batch_tile, 128)
    Bp = _round_up(B, tb)
    n_tiles = Bp // tb

    # --- operand prep: transpose, fc1-bias fold, one-time dtype casts --------
    xT = jnp.concatenate([state.T, jnp.ones((1, B), state.dtype)], axis=0)   # (D+1, B)
    if Bp != B:
        xT = jnp.pad(xT, ((0, 0), (0, Bp - B)))                              # zero tail
    xT = xT.astype(mxu_dtype)
    Dp = D + 1

    w1k = jnp.concatenate(
        [params["w1"].T, params["b1"].reshape(F1, 1)], axis=1).astype(mxu_dtype)  # (F1, D+1)
    w2k = params["w2"].T.astype(mxu_dtype)                    # (F2, F1)
    b2k = params["b2"].reshape(F2, 1).astype(act_dtype)       # (F2, 1)
    w3k = params["w3"].reshape(1, F2).astype(mxu_dtype)       # (1, F2)
    b3k = params["b3"].reshape(1, 1).astype(jnp.float32)      # (1, 1)

    def build(pipeline_mode):
        wkw = {} if pipeline_mode is None else {"pipeline_mode": pipeline_mode}
        wspec = lambda shape: pl.BlockSpec(shape, lambda i: (0, 0), **wkw)
        return pl.pallas_call(
            _critic_kernel,
            out_shape=jax.ShapeDtypeStruct((1, Bp), jnp.float32),
            grid_spec=pltpu.PrefetchScalarGridSpec(
                num_scalar_prefetch=0,
                grid=(n_tiles,),
                in_specs=[
                    pl.BlockSpec((Dp, tb), lambda i: (0, i)),  # state tile (transposed)
                    wspec((F1, Dp)),                           # w1^T | b1 (resident)
                    wspec((F2, F1)),                           # w2^T (resident)
                    wspec((F2, 1)),                            # b2
                    wspec((1, F2)),                            # w3 row
                    wspec((1, 1)),                             # b3
                ],
                out_specs=pl.BlockSpec((1, tb), lambda i: (0, i)),  # lane-dense row
            ),
            compiler_params=pltpu.CompilerParams(
                dimension_semantics=("parallel",),
            ),
        )

    args = (xT, w1k, w2k, b2k, w3k, b3k)
    try:
        # Resident blocks (constant index_map) don't need double buffers.
        out = build(pl.Buffered(1))(*args)
    except Exception:
        # TODO(synk): pl.Buffered(1) single-buffering of resident weights unsupported
        # on this jax version; fall back to default double-buffered resident weights.
        out = build(None)(*args)

    return out.reshape(Bp, 1)[:B]


def init_critic_params(key, input_dim, fc1_dims=256, fc2_dims=256):
    """Deterministic init matching nn.Linear's default U(-1/sqrt(fan_in), 1/sqrt(fan_in))."""
    ks = jax.random.split(key, 6)

    def linear(kw, kb, fan_in, fan_out):
        bound = 1.0 / jnp.sqrt(jnp.float32(fan_in))
        w = jax.random.uniform(kw, (fan_in, fan_out), jnp.float32, -bound, bound)
        b = jax.random.uniform(kb, (1, fan_out), jnp.float32, -bound, bound)
        return w, b

    w1, b1 = linear(ks[0], ks[1], input_dim, fc1_dims)
    w2, b2 = linear(ks[2], ks[3], fc1_dims, fc2_dims)
    w3, b3 = linear(ks[4], ks[5], fc2_dims, 1)
    return {"w1": w1, "b1": b1, "w2": w2, "b2": b2, "w3": w3, "b3": b3}


def critic_forward_ref(state, p):
    h1 = jnp.maximum(state @ p["w1"] + p["b1"], 0.0)
    h2 = jnp.maximum(h1 @ p["w2"] + p["b2"], 0.0)
    return h2 @ p["w3"] + p["b3"]


if __name__ == "__main__":
    key = jax.random.PRNGKey(0)
    k_param, k_s1, k_s2 = jax.random.split(key, 3)

    INPUT_DIM = 8           # input_dims = (8,)
    FC1, FC2 = 256, 256     # module defaults
    params = init_critic_params(k_param, INPUT_DIM, FC1, FC2)

    # Tiny batch, full-f32 path (single tile) -> tight tolerance.
    B1 = 8
    s1 = jax.random.normal(k_s1, (B1, INPUT_DIM), jnp.float32)
    v1 = jax.block_until_ready(critic_forward(s1, params, use_bf16=False))
    r1 = critic_forward_ref(s1, params)
    assert v1.shape == (B1, 1)
    assert jnp.allclose(v1, r1, atol=1e-4, rtol=1e-4), "f32 single-tile mismatch"

    # Batch that is not a tile multiple (>=2-tile grid + tail padding), f32 path.
    B2 = 300
    s2 = jax.random.normal(k_s2, (B2, INPUT_DIM), jnp.float32)
    r2 = critic_forward_ref(s2, params)
    v2 = jax.block_until_ready(critic_forward(s2, params, use_bf16=False))
    assert v2.shape == (B2, 1)
    assert jnp.allclose(v2, r2, atol=1e-4, rtol=1e-4), "f32 multi-tile mismatch"

    # Default fast path: bf16 MXU operands (bf16 epilogue on v6e/v7x), f32 accumulation.
    v2b = jax.block_until_ready(critic_forward(s2, params))
    assert v2b.shape == (B2, 1)
    assert jnp.allclose(v2b, r2, atol=5e-2, rtol=5e-2), "bf16 default path mismatch"

    print("KERNEL_OK")
</pallas_src>

<mosaic_0001>
module attributes {stable_mosaic.version = 11 : i64} {
  func.func @_critic_kernel(%arg0: i32, %arg1: memref<9x8xf32, #tpu.memory_space<vmem>>, %arg2: memref<256x9xf32, #tpu.memory_space<vmem>>, %arg3: memref<256x256xf32, #tpu.memory_space<vmem>>, %arg4: memref<256x1xf32, #tpu.memory_space<vmem>>, %arg5: memref<1x256xf32, #tpu.memory_space<vmem>>, %arg6: memref<1x1xf32, #tpu.memory_space<vmem>>, %arg7: memref<1x8xf32, #tpu.memory_space<vmem>>) attributes {dimension_semantics = [#tpu.dimension_semantics<parallel>], iteration_bounds = array<i64: 1>, scalar_prefetch = 0 : i64, scratch_operands = 0 : i64, tpu.core_type = #tpu.core_type<tc>, window_params = [{transform_indices = @transform_0, window_bounds = array<i64: 9, 8>}, {pipeline_mode = #tpu.pipeline_mode<synchronous>, transform_indices = @transform_1, window_bounds = array<i64: 256, 9>}, {pipeline_mode = #tpu.pipeline_mode<synchronous>, transform_indices = @transform_2, window_bounds = array<i64: 256, 256>}, {pipeline_mode = #tpu.pipeline_mode<synchronous>, transform_indices = @transform_3, window_bounds = array<i64: 256, 1>}, {pipeline_mode = #tpu.pipeline_mode<synchronous>, transform_indices = @transform_4, window_bounds = array<i64: 1, 256>}, {pipeline_mode = #tpu.pipeline_mode<synchronous>, transform_indices = @transform_5, window_bounds = array<i64: 1, 1>}, {transform_indices = @transform_6, window_bounds = array<i64: 1, 8>}]} {
    %c0 = arith.constant 0 : index
    %c0_0 = arith.constant 0 : index
    %0 = vector.load %arg2[%c0, %c0_0] : memref<256x9xf32, #tpu.memory_space<vmem>>, vector<256x9xf32>
    %c0_1 = arith.constant 0 : index
    %c0_2 = arith.constant 0 : index
    %1 = vector.load %arg1[%c0_1, %c0_2] : memref<9x8xf32, #tpu.memory_space<vmem>>, vector<9x8xf32>
    %cst = arith.constant dense<0.000000e+00> : vector<256x8xf32>
    %2 = tpu.matmul %0, %1, %cst {dimension_numbers = #tpu.dot_dimension_numbers<[1], [0], [0], [1], [0, 0, 1, 1], [], []>} : vector<256x9xf32>, vector<9x8xf32>, vector<256x8xf32> -> vector<256x8xf32>
    %cst_3 = arith.constant 0.000000e+00 : f32
    %3 = vector.broadcast %cst_3 : f32 to vector<256x8xf32>
    %4 = arith.maximumf %2, %3 : vector<256x8xf32>
    %c0_4 = arith.constant 0 : index
    %c0_5 = arith.constant 0 : index
    %5 = vector.load %arg3[%c0_4, %c0_5] : memref<256x256xf32, #tpu.memory_space<vmem>>, vector<256x256xf32>
    %cst_6 = arith.constant dense<0.000000e+00> : vector<256x8xf32>
    %6 = tpu.matmul %5, %4, %cst_6 {dimension_numbers = #tpu.dot_dimension_numbers<[1], [0], [0], [1], [0, 0, 1, 1], [], []>} : vector<256x256xf32>, vector<256x8xf32>, vector<256x8xf32> -> vector<256x8xf32>
    %c0_7 = arith.constant 0 : index
    %c0_8 = arith.constant 0 : index
    %7 = vector.load %arg4[%c0_7, %c0_8] : memref<256x1xf32, #tpu.memory_space<vmem>>, vector<256x1xf32>
    %8 = vector.broadcast %7 : vector<256x1xf32> to vector<256x8xf32>
    %9 = arith.addf %6, %8 : vector<256x8xf32>
    %cst_9 = arith.constant 0.000000e+00 : f32
    %10 = vector.broadcast %cst_9 : f32 to vector<256x8xf32>
    %11 = arith.maximumf %9, %10 : vector<256x8xf32>
    %c0_10 = arith.constant 0 : index
    %c0_11 = arith.constant 0 : index
    %12 = vector.load %arg5[%c0_10, %c0_11] : memref<1x256xf32, #tpu.memory_space<vmem>>, vector<1x256xf32>
    %cst_12 = arith.constant dense<0.000000e+00> : vector<1x8xf32>
    %13 = tpu.matmul %12, %11, %cst_12 {dimension_numbers = #tpu.dot_dimension_numbers<[1], [0], [0], [1], [0, 0, 1, 1], [], []>} : vector<1x256xf32>, vector<256x8xf32>, vector<1x8xf32> -> vector<1x8xf32>
    %c0_13 = arith.constant 0 : index
    %c0_14 = arith.constant 0 : index
    %14 = vector.load %arg6[%c0_13, %c0_14] : memref<1x1xf32, #tpu.memory_space<vmem>>, vector<1x1xf32>
    %15 = vector.broadcast %14 : vector<1x1xf32> to vector<1x8xf32>
    %16 = arith.addf %13, %15 : vector<1x8xf32>
    %c0_15 = arith.constant 0 : index
    %c0_16 = arith.constant 0 : index
    %17 = vector.load %arg7[%c0_15, %c0_16] : memref<1x8xf32, #tpu.memory_space<vmem>>, vector<1x8xf32>
    tpu.vector_store %arg7[%c0_15, %c0_16], %16 {strides = array<i32>} : memref<1x8xf32, #tpu.memory_space<vmem>>, vector<1x8xf32>,
    return
  }
  func.func @transform_0(%arg0: i32) -> (i32, i32) {
    %c0_i32 = arith.constant 0 : i32
    %c0_i32_0 = arith.constant 0 : i32
    return %c0_i32, %arg0 : i32, i32
  }
  func.func @transform_1(%arg0: i32) -> (i32, i32) {
    %c0_i32 = arith.constant 0 : i32
    %c0_i32_0 = arith.constant 0 : i32
    %c0_i32_1 = arith.constant 0 : i32
    return %c0_i32, %c0_i32_0 : i32, i32
  }
  func.func @transform_2(%arg0: i32) -> (i32, i32) {
    %c0_i32 = arith.constant 0 : i32
    %c0_i32_0 = arith.constant 0 : i32
    %c0_i32_1 = arith.constant 0 : i32
    return %c0_i32, %c0_i32_0 : i32, i32
  }
  func.func @transform_3(%arg0: i32) -> (i32, i32) {
    %c0_i32 = arith.constant 0 : i32
    %c0_i32_0 = arith.constant 0 : i32
    %c0_i32_1 = arith.constant 0 : i32
    return %c0_i32, %c0_i32_0 : i32, i32
  }
  func.func @transform_4(%arg0: i32) -> (i32, i32) {
    %c0_i32 = arith.constant 0 : i32
    %c0_i32_0 = arith.constant 0 : i32
    %c0_i32_1 = arith.constant 0 : i32
    return %c0_i32, %c0_i32_0 : i32, i32
  }
  func.func @transform_5(%arg0: i32) -> (i32, i32) {
    %c0_i32 = arith.constant 0 : i32
    %c0_i32_0 = arith.constant 0 : i32
    %c0_i32_1 = arith.constant 0 : i32
    return %c0_i32, %c0_i32_0 : i32, i32
  }
  func.func @transform_6(%arg0: i32) -> (i32, i32) {
    %c0_i32 = arith.constant 0 : i32
    %c0_i32_0 = arith.constant 0 : i32
    return %c0_i32, %arg0 : i32, i32
  }
}

module attributes {stable_mosaic.version = 11 : i64} {
  func.func @_critic_kernel(%arg0: i32, %arg1: memref<9x8xf32, #tpu.memory_space<vmem>>, %arg2: memref<256x9xf32, #tpu.memory_space<vmem>>, %arg3: memref<256x256xf32, #tpu.memory_space<vmem>>, %arg4: memref<256x1xf32, #tpu.memory_space<vmem>>, %arg5: memref<1x256xf32, #tpu.memory_space<vmem>>, %arg6: memref<1x1xf32, #tpu.memory_space<vmem>>, %arg7: memref<1x8xf32, #tpu.memory_space<vmem>>) attributes {dimension_semantics = [#tpu.dimension_semantics<parallel>], iteration_bounds = array<i64: 1>, scalar_prefetch = 0 : i64, scratch_operands = 0 : i64, tpu.core_type = #tpu.core_type<tc>, window_params = [{transform_indices = @transform_0, window_bounds = array<i64: 9, 8>}, {pipeline_mode = #tpu.pipeline_mode<synchronous>, transform_indices = @transform_1, window_bounds = array<i64: 256, 9>}, {pipeline_mode = #tpu.pipeline_mode<synchronous>, transform_indices = @transform_2, window_bounds = array<i64: 256, 256>}, {pipeline_mode = #tpu.pipeline_mode<synchronous>, transform_indices = @transform_3, window_bounds = array<i64: 256, 1>}, {pipeline_mode = #tpu.pipeline_mode<synchronous>, transform_indices = @transform_4, window_bounds = array<i64: 1, 256>}, {pipeline_mode = #tpu.pipeline_mode<synchronous>, transform_indices = @transform_5, window_bounds = array<i64: 1, 1>}, {transform_indices = @transform_6, window_bounds = array<i64: 1, 8>}]} {
    %c0 = arith.constant 0 : index
    %c0_0 = arith.constant 0 : index
    %0 = vector.load %arg2[%c0, %c0_0] : memref<256x9xf32, #tpu.memory_space<vmem>>, vector<256x9xf32>
    %c0_1 = arith.constant 0 : index
    %c0_2 = arith.constant 0 : index
    %1 = vector.load %arg1[%c0_1, %c0_2] : memref<9x8xf32, #tpu.memory_space<vmem>>, vector<9x8xf32>
    %cst = arith.constant dense<0.000000e+00> : vector<256x8xf32>
    %2 = tpu.matmul %0, %1, %cst {dimension_numbers = #tpu.dot_dimension_numbers<[1], [0], [0], [1], [0, 0, 1, 1], [], []>} : vector<256x9xf32>, vector<9x8xf32>, vector<256x8xf32> -> vector<256x8xf32>
    %cst_3 = arith.constant 0.000000e+00 : f32
    %3 = vector.broadcast %cst_3 : f32 to vector<256x8xf32>
    %4 = arith.maximumf %2, %3 : vector<256x8xf32>
    %c0_4 = arith.constant 0 : index
    %c0_5 = arith.constant 0 : index
    %5 = vector.load %arg3[%c0_4, %c0_5] : memref<256x256xf32, #tpu.memory_space<vmem>>, vector<256x256xf32>
    %cst_6 = arith.constant dense<0.000000e+00> : vector<256x8xf32>
    %6 = tpu.matmul %5, %4, %cst_6 {dimension_numbers = #tpu.dot_dimension_numbers<[1], [0], [0], [1], [0, 0, 1, 1], [], []>} : vector<256x256xf32>, vector<256x8xf32>, vector<256x8xf32> -> vector<256x8xf32>
    %c0_7 = arith.constant 0 : index
    %c0_8 = arith.constant 0 : index
    %7 = vector.load %arg4[%c0_7, %c0_8] : memref<256x1xf32, #tpu.memory_space<vmem>>, vector<256x1xf32>
    %8 = vector.broadcast %7 : vector<256x1xf32> to vector<256x8xf32>
    %9 = arith.addf %6, %8 : vector<256x8xf32>
    %cst_9 = arith.constant 0.000000e+00 : f32
    %10 = vector.broadcast %cst_9 : f32 to vector<256x8xf32>
    %11 = arith.maximumf %9, %10 : vector<256x8xf32>
    %c0_10 = arith.constant 0 : index
    %c0_11 = arith.constant 0 : index
    %12 = vector.load %arg5[%c0_10, %c0_11] : memref<1x256xf32, #tpu.memory_space<vmem>>, vector<1x256xf32>
    %cst_12 = arith.constant dense<0.000000e+00> : vector<1x8xf32>
    %13 = tpu.matmul %12, %11, %cst_12 {dimension_numbers = #tpu.dot_dimension_numbers<[1], [0], [0], [1], [0, 0, 1, 1], [], []>} : vector<1x256xf32>, vector<256x8xf32>, vector<1x8xf32> -> vector<1x8xf32>
    %c0_13 = arith.constant 0 : index
    %c0_14 = arith.constant 0 : index
    %14 = vector.load %arg6[%c0_13, %c0_14] : memref<1x1xf32, #tpu.memory_space<vmem>>, vector<1x1xf32>
    %15 = vector.broadcast %14 : vector<1x1xf32> to vector<1x8xf32>
    %16 = arith.addf %13, %15 : vector<1x8xf32>
    %c0_15 = arith.constant 0 : index
    %c0_16 = arith.constant 0 : index
    %17 = vector.load %arg7[%c0_15, %c0_16] : memref<1x8xf32, #tpu.memory_space<vmem>>, vector<1x8xf32>
    tpu.vector_store %arg7[%c0_15, %c0_16], %16 {strides = array<i32>} : memref<1x8xf32, #tpu.memory_space<vmem>>, vector<1x8xf32>,
    return
  }
  func.func @transform_0(%arg0: i32) -> (i32, i32) {
    %c0_i32 = arith.constant 0 : i32
    %c0_i32_0 = arith.constant 0 : i32
    return %c0_i32, %arg0 : i32, i32
  }
  func.func @transform_1(%arg0: i32) -> (i32, i32) {
    %c0_i32 = arith.constant 0 : i32
    %c0_i32_0 = arith.constant 0 : i32
    %c0_i32_1 = arith.constant 0 : i32
    return %c0_i32, %c0_i32_0 : i32, i32
  }
  func.func @transform_2(%arg0: i32) -> (i32, i32) {
    %c0_i32 = arith.constant 0 : i32
    %c0_i32_0 = arith.constant 0 : i32
    %c0_i32_1 = arith.constant 0 : i32
    return %c0_i32, %c0_i32_0 : i32, i32
  }
  func.func @transform_3(%arg0: i32) -> (i32, i32) {
    %c0_i32 = arith.constant 0 : i32
    %c0_i32_0 = arith.constant 0 : i32
    %c0_i32_1 = arith.constant 0 : i32
    return %c0_i32, %c0_i32_0 : i32, i32
  }
  func.func @transform_4(%arg0: i32) -> (i32, i32) {
    %c0_i32 = arith.constant 0 : i32
    %c0_i32_0 = arith.constant 0 : i32
    %c0_i32_1 = arith.constant 0 : i32
    return %c0_i32, %c0_i32_0 : i32, i32
  }
  func.func @transform_5(%arg0: i32) -> (i32, i32) {
    %c0_i32 = arith.constant 0 : i32
    %c0_i32_0 = arith.constant 0 : i32
    %c0_i32_1 = arith.constant 0 : i32
    return %c0_i32, %c0_i32_0 : i32, i32
  }
  func.func @transform_6(%arg0: i32) -> (i32, i32) {
    %c0_i32 = arith.constant 0 : i32
    %c0_i32_0 = arith.constant 0 : i32
    return %c0_i32, %arg0 : i32, i32
  }
}

</mosaic_0001>

<llo_original>
// kernel: tpu_custom_call.1
$region0: #{tpu_custom_call.1}
  #allocation0 [shape = 'u32[]', space=smem, size = 0x4, offset = 0x4, fixed_abs, tag = 'smem constant byte address 0x4 - core index']
  #allocation1 [shape = 'u32[72,128]{1,0:T(1,128)}', space=vmem, size = 0x9000, scoped, tag = 'internal scratch']
  #allocation2 [shape = 'f32[1,1]{1,0:T(1,128)S(1)}', space=vmem, size = 0x200, scoped, tag = 'scoped memory for tpu_custom_call.1']
  %s0 = inlined_call_operand.vmem [shape: f32[9,8], index: 0, kind: input, shape index: {}]
  %s1 = inlined_call_operand.vmem [shape: f32[256,9], index: 1, kind: input, shape index: {}]
  %s2 = inlined_call_operand.vmem [shape: f32[256,256], index: 2, kind: input, shape index: {}]
  %s3 = inlined_call_operand.vmem [shape: f32[256,1], index: 3, kind: input, shape index: {}]
  %s4 = inlined_call_operand.vmem [shape: f32[1,256], index: 4, kind: input, shape index: {}]
  %s5 = inlined_call_operand.<no memory space> [shape: f32[1,1], index: 5, kind: input, shape index: {}]
  %s6 = inlined_call_operand.hbm [shape: f32[1,8], index: 6, kind: output, shape index: {}]
  %s7 = sld [smem:[#allocation0]]
  $region34: #{tpu_custom_call.1} parent=0
    _
  %s9 = ssub.s32 1, %s7
  %s10 = scalar_select 0, %s9, %s7
  %v11 = vstv %s5
  %12 = vst [vmem:[#allocation2] sm:$0x1] %v11
  $region1: #{tpu_custom_call.1} parent=0
    #allocation3 [shape = 'u8[512]{0}', space=vmem, size = 0x400, scoped, tag = 'output window, operand 0, single buffered']
    #allocation4 [shape = 's32[1]{0}', space=sflag, size = 0x4, scoped, tag = 'scoped memory for tpu_custom_call.1']
    %13 = vsyncpa [#allocation4], 0
    // Predicated region
    $region2: #{tpu_custom_call.1} parent=1 // pred_check
      _
    $region3: #{tpu_custom_call.1} parent=1 // pred_check_branch
      %15 = sbr.rel (0) target = $region5
    $region4: #{tpu_custom_call.1} parent=1 // pred_region
      _
    $region5: #{tpu_custom_call.1} parent=1 // pred_fallthru
      _
    // Predicated region
    $region6: #{tpu_custom_call.1} parent=1 // pred_check
      _
    $region7: #{tpu_custom_call.1} parent=1 // pred_check_branch
      %17 = sbr.rel (0) target = $region9
    $region8: #{tpu_custom_call.1} parent=1 // pred_region
      _
    $region9: #{tpu_custom_call.1} parent=1 // pred_fallthru
      _
    // Predicated region
    $region10: #{tpu_custom_call.1} parent=1 // pred_check
      _
    $region11: #{tpu_custom_call.1} parent=1 // pred_check_branch
      %19 = sbr.rel (0) target = $region13
    $region12: #{tpu_custom_call.1} parent=1 // pred_region
      _
    $region13: #{tpu_custom_call.1} parent=1 // pred_fallthru
      _
    // Predicated region
    $region14: #{tpu_custom_call.1} parent=1 // pred_check
      _
    $region15: #{tpu_custom_call.1} parent=1 // pred_check_branch
      %21 = sbr.rel (0) target = $region17
    $region16: #{tpu_custom_call.1} parent=1 // pred_region
      _
    $region17: #{tpu_custom_call.1} parent=1 // pred_fallthru
      _
    // Predicated region
    $region18: #{tpu_custom_call.1} parent=1 // pred_check
      _
    $region19: #{tpu_custom_call.1} parent=1 // pred_check_branch
      %23 = sbr.rel (0) target = $region21
    $region20: #{tpu_custom_call.1} parent=1 // pred_region
      _
    $region21: #{tpu_custom_call.1} parent=1 // pred_fallthru
      _
    // Predicated region
    $region22: #{tpu_custom_call.1} parent=1 // pred_check
      _
    $region23: #{tpu_custom_call.1} parent=1 // pred_check_branch
      %25 = sbr.rel (0) target = $region25
    $region24: #{tpu_custom_call.1} parent=1 // pred_region
      _
    $region25: #{tpu_custom_call.1} parent=1 // pred_fallthru
      _
    %v26 = vld [vmem:[%s1] sm:$0xff]
    %v27 = vld [vmem:[%s1 + $0x8] sm:$0xff]
    %v28 = vld [vmem:[%s1 + $0x10] sm:$0xff]
    %v29 = vld [vmem:[%s1 + $0x18] sm:$0xff]
    %v30 = vld [vmem:[%s1 + $0x20] sm:$0xff]
    %v31 = vld [vmem:[%s1 + $0x28] sm:$0xff]
    %v32 = vld [vmem:[%s1 + $0x30] sm:$0xff]
    %v33 = vld [vmem:[%s1 + $0x38] sm:$0xff]
    %v34 = vld [vmem:[%s1 + $0x40] sm:$0xff]
    %v35 = vld [vmem:[%s1 + $0x48] sm:$0xff]
    %v36 = vld [vmem:[%s1 + $0x50] sm:$0xff]
    %v37 = vld [vmem:[%s1 + $0x58] sm:$0xff]
    %v38 = vld [vmem:[%s1 + $0x60] sm:$0xff]
    %v39 = vld [vmem:[%s1 + $0x68] sm:$0xff]
    %v40 = vld [vmem:[%s1 + $0x70] sm:$0xff]
    %v41 = vld [vmem:[%s1 + $0x78] sm:$0xff]
    %v42 = vld [vmem:[%s1 + $0x80] sm:$0xff]
    %v43 = vld [vmem:[%s1 + $0x88] sm:$0xff]
    %v44 = vld [vmem:[%s1 + $0x90] sm:$0xff]
    %v45 = vld [vmem:[%s1 + $0x98] sm:$0xff]
    %v46 = vld [vmem:[%s1 + $0xa0] sm:$0xff]
    %v47 = vld [vmem:[%s1 + $0xa8] sm:$0xff]
    %v48 = vld [vmem:[%s1 + $0xb0] sm:$0xff]
    %v49 = vld [vmem:[%s1 + $0xb8] sm:$0xff]
    %v50 = vld [vmem:[%s1 + $0xc0] sm:$0xff]
    %v51 = vld [vmem:[%s1 + $0xc8] sm:$0xff]
    %v52 = vld [vmem:[%s1 + $0xd0] sm:$0xff]
    %v53 = vld [vmem:[%s1 + $0xd8] sm:$0xff]
    %v54 = vld [vmem:[%s1 + $0xe0] sm:$0xff]
    %v55 = vld [vmem:[%s1 + $0xe8] sm:$0xff]
    %v56 = vld [vmem:[%s1 + $0xf0] sm:$0xff]
    %v57 = vld [vmem:[%s1 + $0xf8] sm:$0xff]
    %v58 = vld [vmem:[%s0] sm:$0xff]
    %v59 = vld [vmem:[%s0 + $0x8] sm:$0x1]
    %vm60 = vcmask 72704
    %v62 = vsel %vm60, %v26, 0
    %v65 = vsel %vm60, %v27, 0
    %v68 = vsel %vm60, %v28, 0
    %v71 = vsel %vm60, %v29, 0
    %v74 = vsel %vm60, %v30, 0
    %v77 = vsel %vm60, %v31, 0
    %v80 = vsel %vm60, %v32, 0
    %v83 = vsel %vm60, %v33, 0
    %v86 = vsel %vm60, %v34, 0
    %v89 = vsel %vm60, %v35, 0
    %v92 = vsel %vm60, %v36, 0
    %v95 = vsel %vm60, %v37, 0
    %v98 = vsel %vm60, %v38, 0
    %v101 = vsel %vm60, %v39, 0
    %v104 = vsel %vm60, %v40, 0
    %v107 = vsel %vm60, %v41, 0
    %v110 = vsel %vm60, %v42, 0
    %v113 = vsel %vm60, %v43, 0
    %v116 = vsel %vm60, %v44, 0
    %v119 = vsel %vm60, %v45, 0
    %v122 = vsel %vm60, %v46, 0
    %v125 = vsel %vm60, %v47, 0
    %v128 = vsel %vm60, %v48, 0
    %v131 = vsel %vm60, %v49, 0
    %v134 = vsel %vm60, %v50, 0
    %v137 = vsel %vm60, %v51, 0
    %v140 = vsel %vm60, %v52, 0
    %v143 = vsel %vm60, %v53, 0
    %v146 = vsel %vm60, %v54, 0
    %v149 = vsel %vm60, %v55, 0
    %v152 = vsel %vm60, %v56, 0
    %v155 = vsel %vm60, %v57, 0
    %vm157 = vcmask 1040384
    %v159 = vsel %vm157, %v59, 0
    %161 = vmatpush.msra.mxu0 0.0
    %162 = vmatpush.msra.mxu0 0.0
    %163 = vmatpush.msra.mxu0 0.0
    %164 = vmatpush.msra.mxu0 0.0
    %165 = vmatpush.msra.mxu0 0.0
    %166 = vmatpush.msra.mxu0 0.0
    %167 = vmatpush.msra.mxu0 0.0
    %168 = vmatpush.msra.mxu0 0.0
    %169 = vmatpush.msra.mxu0 0.0
    %170 = vmatpush.msra.mxu0 0.0
    %171 = vmatpush.msra.mxu0 0.0
    %172 = vmatpush.msra.mxu0 0.0
    %173 = vmatpush.msra.mxu0 0.0
    %174 = vmatpush.msra.mxu0 0.0
    %175 = vmatpush.msra.mxu0 %v159
    %176 = vmatpush.msra.mxu0 %v58
    %177 = vmatmul.f32.gmra.mxu0 %v62
    %v178 = vpop.f32.mrf.mxu0
    %v179 = vadd.f32 0.0, %v178
    %180 = vmatmul.f32.gmra.mxu0 %v65
    %v181 = vpop.f32.mrf.mxu0
    %v182 = vadd.f32 0.0, %v181
    %183 = vmatmul.f32.gmra.mxu0 %v68
    %v184 = vpop.f32.mrf.mxu0
    %v185 = vadd.f32 0.0, %v184
    %186 = vmatmul.f32.gmra.mxu0 %v71
    %v187 = vpop.f32.mrf.mxu0
    %v188 = vadd.f32 0.0, %v187
    %189 = vmatmul.f32.gmra.mxu0 %v74
    %v190 = vpop.f32.mrf.mxu0
    %v191 = vadd.f32 0.0, %v190
    %192 = vmatmul.f32.gmra.mxu0 %v77
    %v193 = vpop.f32.mrf.mxu0
    %v194 = vadd.f32 0.0, %v193
    %195 = vmatmul.f32.gmra.mxu0 %v80
    %v196 = vpop.f32.mrf.mxu0
    %v197 = vadd.f32 0.0, %v196
    %198 = vmatmul.f32.gmra.mxu0 %v83
    %v199 = vpop.f32.mrf.mxu0
    %v200 = vadd.f32 0.0, %v199
    %201 = vmatmul.f32.gmra.mxu0 %v86
    %v202 = vpop.f32.mrf.mxu0
    %v203 = vadd.f32 0.0, %v202
    %204 = vmatmul.f32.gmra.mxu0 %v89
    %v205 = vpop.f32.mrf.mxu0
    %v206 = vadd.f32 0.0, %v205
    %207 = vmatmul.f32.gmra.mxu0 %v92
    %v208 = vpop.f32.mrf.mxu0
    %v209 = vadd.f32 0.0, %v208
    %210 = vmatmul.f32.gmra.mxu0 %v95
    %v211 = vpop.f32.mrf.mxu0
    %v212 = vadd.f32 0.0, %v211
    %213 = vmatmul.f32.gmra.mxu0 %v98
    %v214 = vpop.f32.mrf.mxu0
    %v215 = vadd.f32 0.0, %v214
    %216 = vmatmul.f32.gmra.mxu0 %v101
    %v217 = vpop.f32.mrf.mxu0
    %v218 = vadd.f32 0.0, %v217
    %219 = vmatmul.f32.gmra.mxu0 %v104
    %v220 = vpop.f32.mrf.mxu0
    %v221 = vadd.f32 0.0, %v220
    %222 = vmatmul.f32.gmra.mxu0 %v107
    %v223 = vpop.f32.mrf.mxu0
    %v224 = vadd.f32 0.0, %v223
    %225 = vmatmul.f32.gmra.mxu0 %v110
    %v226 = vpop.f32.mrf.mxu0
    %v227 = vadd.f32 0.0, %v226
    %228 = vmatmul.f32.gmra.mxu0 %v113
    %v229 = vpop.f32.mrf.mxu0
    %v230 = vadd.f32 0.0, %v229
    %231 = vmatmul.f32.gmra.mxu0 %v116
    %v232 = vpop.f32.mrf.mxu0
    %v233 = vadd.f32 0.0, %v232
    %234 = vmatmul.f32.gmra.mxu0 %v119
    %v235 = vpop.f32.mrf.mxu0
    %v236 = vadd.f32 0.0, %v235
    %237 = vmatmul.f32.gmra.mxu0 %v122
    %v238 = vpop.f32.mrf.mxu0
    %v239 = vadd.f32 0.0, %v238
    %240 = vmatmul.f32.gmra.mxu0 %v125
    %v241 = vpop.f32.mrf.mxu0
    %v242 = vadd.f32 0.0, %v241
    %243 = vmatmul.f32.gmra.mxu0 %v128
    %v244 = vpop.f32.mrf.mxu0
    %v245 = vadd.f32 0.0, %v244
    %246 = vmatmul.f32.gmra.mxu0 %v131
    %v247 = vpop.f32.mrf.mxu0
    %v248 = vadd.f32 0.0, %v247
    %249 = vmatmul.f32.gmra.mxu0 %v134
    %v250 = vpop.f32.mrf.mxu0
    %v251 = vadd.f32 0.0, %v250
    %252 = vmatmul.f32.gmra.mxu0 %v137
    %v253 = vpop.f32.mrf.mxu0
    %v254 = vadd.f32 0.0, %v253
    %255 = vmatmul.f32.gmra.mxu0 %v140
    %v256 = vpop.f32.mrf.mxu0
    %v257 = vadd.f32 0.0, %v256
    %258 = vmatmul.f32.gmra.mxu0 %v143
    %v259 = vpop.f32.mrf.mxu0
    %v260 = vadd.f32 0.0, %v259
    %261 = vmatmul.f32.gmra.mxu0 %v146
    %v262 = vpop.f32.mrf.mxu0
    %v263 = vadd.f32 0.0, %v262
    %264 = vmatmul.f32.gmra.mxu0 %v149
    %v265 = vpop.f32.mrf.mxu0
    %v266 = vadd.f32 0.0, %v265
    %267 = vmatmul.f32.gmra.mxu0 %v152
    %v268 = vpop.f32.mrf.mxu0
    %v269 = vadd.f32 0.0, %v268
    %270 = vmatmul.f32.gmra.mxu0 %v155
    %v271 = vpop.f32.mrf.mxu0
    %v272 = vadd.f32 0.0, %v271
    %273 = vdwg.mxu0
    %v274 = vmax.f32 %v179, 0.0
    %v275 = vmax.f32 %v182, 0.0
    %v276 = vmax.f32 %v185, 0.0
    %v277 = vmax.f32 %v188, 0.0
    %v278 = vmax.f32 %v191, 0.0
    %v279 = vmax.f32 %v194, 0.0
    %v280 = vmax.f32 %v197, 0.0
    %v281 = vmax.f32 %v200, 0.0
    %v282 = vmax.f32 %v203, 0.0
    %v283 = vmax.f32 %v206, 0.0
    %v284 = vmax.f32 %v209, 0.0
    %v285 = vmax.f32 %v212, 0.0
    %v286 = vmax.f32 %v215, 0.0
    %v287 = vmax.f32 %v218, 0.0
    %v288 = vmax.f32 %v221, 0.0
    %v289 = vmax.f32 %v224, 0.0
    %v290 = vmax.f32 %v227, 0.0
    %v291 = vmax.f32 %v230, 0.0
    %v292 = vmax.f32 %v233, 0.0
    %v293 = vmax.f32 %v236, 0.0
    %v294 = vmax.f32 %v239, 0.0
    %v295 = vmax.f32 %v242, 0.0
    %v296 = vmax.f32 %v245, 0.0
    %v297 = vmax.f32 %v248, 0.0
    %v298 = vmax.f32 %v251, 0.0
    %v299 = vmax.f32 %v254, 0.0
    %v300 = vmax.f32 %v257, 0.0
    %v301 = vmax.f32 %v260, 0.0
    %v302 = vmax.f32 %v263, 0.0
    %v303 = vmax.f32 %v266, 0.0
    %v304 = vmax.f32 %v269, 0.0
    %v305 = vmax.f32 %v272, 0.0
    %v306 = vld [vmem:[%s2] sm:$0xff]
    %v307 = vld [vmem:[%s2 + $0x8] sm:$0xff]
    %v308 = vld [vmem:[%s2 + $0x10] sm:$0xff]
    %v309 = vld [vmem:[%s2 + $0x18] sm:$0xff]
    %v310 = vld [vmem:[%s2 + $0x20] sm:$0xff]
    %v311 = vld [vmem:[%s2 + $0x28] sm:$0xff]
    %v312 = vld [vmem:[%s2 + $0x30] sm:$0xff]
    %v313 = vld [vmem:[%s2 + $0x38] sm:$0xff]
    %v314 = vld [vmem:[%s2 + $0x40] sm:$0xff]
    %v315 = vld [vmem:[%s2 + $0x48] sm:$0xff]
    %v316 = vld [vmem:[%s2 + $0x50] sm:$0xff]
    %v317 = vld [vmem:[%s2 + $0x58] sm:$0xff]
    %v318 = vld [vmem:[%s2 + $0x60] sm:$0xff]
    %v319 = vld [vmem:[%s2 + $0x68] sm:$0xff]
    %v320 = vld [vmem:[%s2 + $0x70] sm:$0xff]
    %v321 = vld [vmem:[%s2 + $0x78] sm:$0xff]
    %v322 = vld [vmem:[%s2 + $0x80] sm:$0xff]
    %v323 = vld [vmem:[%s2 + $0x88] sm:$0xff]
    %v324 = vld [vmem:[%s2 + $0x90] sm:$0xff]
    %v325 = vld [vmem:[%s2 + $0x98] sm:$0xff]
    %v326 = vld [vmem:[%s2 + $0xa0] sm:$0xff]
    %v327 = vld [vmem:[%s2 + $0xa8] sm:$0xff]
    %v328 = vld [vmem:[%s2 + $0xb0] sm:$0xff]
    %v329 = vld [vmem:[%s2 + $0xb8] sm:$0xff]
    %v330 = vld [vmem:[%s2 + $0xc0] sm:$0xff]
    %v331 = vld [vmem:[%s2 + $0xc8] sm:$0xff]
    %v332 = vld [vmem:[%s2 + $0xd0] sm:$0xff]
    %v333 = vld [vmem:[%s2 + $0xd8] sm:$0xff]
    %v334 = vld [vmem:[%s2 + $0xe0] sm:$0xff]
    %v335 = vld [vmem:[%s2 + $0xe8] sm:$0xff]
    %v336 = vld [vmem:[%s2 + $0xf0] sm:$0xff]
    %v337 = vld [vmem:[%s2 + $0xf8] sm:$0xff]
    %v338 = vld [vmem:[%s2 + $0x100] sm:$0xff]
    %v339 = vld [vmem:[%s2 + $0x108] sm:$0xff]
    %v340 = vld [vmem:[%s2 + $0x110] sm:$0xff]
    %v341 = vld [vmem:[%s2 + $0x118] sm:$0xff]
    %v342 = vld [vmem:[%s2 + $0x120] sm:$0xff]
    %v343 = vld [vmem:[%s2 + $0x128] sm:$0xff]
    %v344 = vld [vmem:[%s2 + $0x130] sm:$0xff]
    %v345 = vld [vmem:[%s2 + $0x138] sm:$0xff]
    %v346 = vld [vmem:[%s2 + $0x140] sm:$0xff]
    %v347 = vld [vmem:[%s2 + $0x148] sm:$0xff]
    %v348 = vld [vmem:[%s2 + $0x150] sm:$0xff]
    %v349 = vld [vmem:[%s2 + $0x158] sm:$0xff]
    %v350 = vld [vmem:[%s2 + $0x160] sm:$0xff]
    %v351 = vld [vmem:[%s2 + $0x168] sm:$0xff]
    %v352 = vld [vmem:[%s2 + $0x170] sm:$0xff]
    %v353 = vld [vmem:[%s2 + $0x178] sm:$0xff]
    %v354 = vld [vmem:[%s2 + $0x180] sm:$0xff]
    %v355 = vld [vmem:[%s2 + $0x188] sm:$0xff]
    %v356 = vld [vmem:[%s2 + $0x190] sm:$0xff]
    %v357 = vld [vmem:[%s2 + $0x198] sm:$0xff]
    %v358 = vld [vmem:[%s2 + $0x1a0] sm:$0xff]
    %v359 = vld [vmem:[%s2 + $0x1a8] sm:$0xff]
    %v360 = vld [vmem:[%s2 + $0x1b0] sm:$0xff]
    %v361 = vld [vmem:[%s2 + $0x1b8] sm:$0xff]
    %v362 = vld [vmem:[%s2 + $0x1c0] sm:$0xff]
    %v363 = vld [vmem:[%s2 + $0x1c8] sm:$0xff]
    %v364 = vld [vmem:[%s2 + $0x1d0] sm:$0xff]
    %v365 = vld [vmem:[%s2 + $0x1d8] sm:$0xff]
    %v366 = vld [vmem:[%s2 + $0x1e0] sm:$0xff]
    %v367 = vld [vmem:[%s2 + $0x1e8] sm:$0xff]
    %v368 = vld [vmem:[%s2 + $0x1f0] sm:$0xff]
    %v369 = vld [vmem:[%s2 + $0x1f8] sm:$0xff]
    %v370 = vld [vmem:[%s3] sm:$0xff]
    %v371 = vld [vmem:[%s3 + $0x8] sm:$0xff]
    %v372 = vld [vmem:[%s3 + $0x10] sm:$0xff]
    %v373 = vld [vmem:[%s3 + $0x18] sm:$0xff]
    %v374 = vld [vmem:[%s3 + $0x20] sm:$0xff]
    %v375 = vld [vmem:[%s3 + $0x28] sm:$0xff]
    %v376 = vld [vmem:[%s3 + $0x30] sm:$0xff]
    %v377 = vld [vmem:[%s3 + $0x38] sm:$0xff]
    %v378 = vld [vmem:[%s3 + $0x40] sm:$0xff]
    %v379 = vld [vmem:[%s3 + $0x48] sm:$0xff]
    %v380 = vld [vmem:[%s3 + $0x50] sm:$0xff]
    %v381 = vld [vmem:[%s3 + $0x58] sm:$0xff]
    %v382 = vld [vmem:[%s3 + $0x60] sm:$0xff]
    %v383 = vld [vmem:[%s3 + $0x68] sm:$0xff]
    %v384 = vld [vmem:[%s3 + $0x70] sm:$0xff]
    %v385 = vld [vmem:[%s3 + $0x78] sm:$0xff]
    %v386 = vld [vmem:[%s3 + $0x80] sm:$0xff]
    %v387 = vld [vmem:[%s3 + $0x88] sm:$0xff]
    %v388 = vld [vmem:[%s3 + $0x90] sm:$0xff]
    %v389 = vld [vmem:[%s3 + $0x98] sm:$0xff]
    %v390 = vld [vmem:[%s3 + $0xa0] sm:$0xff]
    %v391 = vld [vmem:[%s3 + $0xa8] sm:$0xff]
    %v392 = vld [vmem:[%s3 + $0xb0] sm:$0xff]
    %v393 = vld [vmem:[%s3 + $0xb8] sm:$0xff]
    %v394 = vld [vmem:[%s3 + $0xc0] sm:$0xff]
    %v395 = vld [vmem:[%s3 + $0xc8] sm:$0xff]
    %v396 = vld [vmem:[%s3 + $0xd0] sm:$0xff]
    %v397 = vld [vmem:[%s3 + $0xd8] sm:$0xff]
    %v398 = vld [vmem:[%s3 + $0xe0] sm:$0xff]
    %v399 = vld [vmem:[%s3 + $0xe8] sm:$0xff]
    %v400 = vld [vmem:[%s3 + $0xf0] sm:$0xff]
    %v401 = vld [vmem:[%s3 + $0xf8] sm:$0xff]
    %403 = vset.pattern.permute.xlu0 0
    %404 = vperm.xlu0 %403, %v370
    %v405 = vpop.permute.xlu0 %404
    %408 = vset.pattern.permute.xlu0 0
    %409 = vperm.xlu0 %408, %v371
    %v410 = vpop.permute.xlu0 %409
    %413 = vset.pattern.permute.xlu0 0
    %414 = vperm.xlu0 %413, %v372
    %v415 = vpop.permute.xlu0 %414
    %418 = vset.pattern.permute.xlu0 0
    %419 = vperm.xlu0 %418, %v373
    %v420 = vpop.permute.xlu0 %419
    %423 = vset.pattern.permute.xlu0 0
    %424 = vperm.xlu0 %423, %v374
    %v425 = vpop.permute.xlu0 %424
    %428 = vset.pattern.permute.xlu0 0
    %429 = vperm.xlu0 %428, %v375
    %v430 = vpop.permute.xlu0 %429
    %433 = vset.pattern.permute.xlu0 0
    %434 = vperm.xlu0 %433, %v376
    %v435 = vpop.permute.xlu0 %434
    %438 = vset.pattern.permute.xlu0 0
    %439 = vperm.xlu0 %438, %v377
    %v440 = vpop.permute.xlu0 %439
    %443 = vset.pattern.permute.xlu0 0
    %444 = vperm.xlu0 %443, %v378
    %v445 = vpop.permute.xlu0 %444
    %448 = vset.pattern.permute.xlu0 0
    %449 = vperm.xlu0 %448, %v379
    %v450 = vpop.permute.xlu0 %449
    %453 = vset.pattern.permute.xlu0 0
    %454 = vperm.xlu0 %453, %v380
    %v455 = vpop.permute.xlu0 %454
    %458 = vset.pattern.permute.xlu0 0
    %459 = vperm.xlu0 %458, %v381
    %v460 = vpop.permute.xlu0 %459
    %463 = vset.pattern.permute.xlu0 0
    %464 = vperm.xlu0 %463, %v382
    %v465 = vpop.permute.xlu0 %464
    %468 = vset.pattern.permute.xlu0 0
    %469 = vperm.xlu0 %468, %v383
    %v470 = vpop.permute.xlu0 %469
    %473 = vset.pattern.permute.xlu0 0
    %474 = vperm.xlu0 %473, %v384
    %v475 = vpop.permute.xlu0 %474
    %478 = vset.pattern.permute.xlu0 0
    %479 = vperm.xlu0 %478, %v385
    %v480 = vpop.permute.xlu0 %479
    %483 = vset.pattern.permute.xlu0 0
    %484 = vperm.xlu0 %483, %v386
    %v485 = vpop.permute.xlu0 %484
    %488 = vset.pattern.permute.xlu0 0
    %489 = vperm.xlu0 %488, %v387
    %v490 = vpop.permute.xlu0 %489
    %493 = vset.pattern.permute.xlu0 0
    %494 = vperm.xlu0 %493, %v388
    %v495 = vpop.permute.xlu0 %494
    %498 = vset.pattern.permute.xlu0 0
    %499 = vperm.xlu0 %498, %v389
    %v500 = vpop.permute.xlu0 %499
    %503 = vset.pattern.permute.xlu0 0
    %504 = vperm.xlu0 %503, %v390
    %v505 = vpop.permute.xlu0 %504
    %508 = vset.pattern.permute.xlu0 0
    %509 = vperm.xlu0 %508, %v391
    %v510 = vpop.permute.xlu0 %509
    %513 = vset.pattern.permute.xlu0 0
    %514 = vperm.xlu0 %513, %v392
    %v515 = vpop.permute.xlu0 %514
    %518 = vset.pattern.permute.xlu0 0
    %519 = vperm.xlu0 %518, %v393
    %v520 = vpop.permute.xlu0 %519
    %523 = vset.pattern.permute.xlu0 0
    %524 = vperm.xlu0 %523, %v394
    %v525 = vpop.permute.xlu0 %524
    %528 = vset.pattern.permute.xlu0 0
    %529 = vperm.xlu0 %528, %v395
    %v530 = vpop.permute.xlu0 %529
    %533 = vset.pattern.permute.xlu0 0
    %534 = vperm.xlu0 %533, %v396
    %v535 = vpop.permute.xlu0 %534
    %538 = vset.pattern.permute.xlu0 0
    %539 = vperm.xlu0 %538, %v397
    %v540 = vpop.permute.xlu0 %539
    %543 = vset.pattern.permute.xlu0 0
    %544 = vperm.xlu0 %543, %v398
    %v545 = vpop.permute.xlu0 %544
    %548 = vset.pattern.permute.xlu0 0
    %549 = vperm.xlu0 %548, %v399
    %v550 = vpop.permute.xlu0 %549
    %553 = vset.pattern.permute.xlu0 0
    %554 = vperm.xlu0 %553, %v400
    %v555 = vpop.permute.xlu0 %554
    %558 = vset.pattern.permute.xlu0 0
    %559 = vperm.xlu0 %558, %v401
    %v560 = vpop.permute.xlu0 %559
    %562 = vmatpush.msra.mxu0 %v289
    %563 = vmatpush.msra.mxu0 %v288
    %564 = vmatpush.msra.mxu0 %v287
    %565 = vmatpush.msra.mxu0 %v286
    %566 = vmatpush.msra.mxu0 %v285
    %567 = vmatpush.msra.mxu0 %v284
    %568 = vmatpush.msra.mxu0 %v283
    %569 = vmatpush.msra.mxu0 %v282
    %570 = vmatpush.msra.mxu0 %v281
    %571 = vmatpush.msra.mxu0 %v280
    %572 = vmatpush.msra.mxu0 %v279
    %573 = vmatpush.msra.mxu0 %v278
    %574 = vmatpush.msra.mxu0 %v277
    %575 = vmatpush.msra.mxu0 %v276
    %576 = vmatpush.msra.mxu0 %v275
    %577 = vmatpush.msra.mxu0 %v274
    %578 = vmatmul.f32.gmra.mxu0 %v306
    %v579 = vpop.f32.mrf.mxu0
    %v580 = vadd.f32 %v405, %v579
    %581 = vmatmul.f32.gmra.mxu0 %v308
    %v582 = vpop.f32.mrf.mxu0
    %v583 = vadd.f32 %v410, %v582
    %584 = vmatmul.f32.gmra.mxu0 %v310
    %v585 = vpop.f32.mrf.mxu0
    %v586 = vadd.f32 %v415, %v585
    %587 = vmatmul.f32.gmra.mxu0 %v312
    %v588 = vpop.f32.mrf.mxu0
    %v589 = vadd.f32 %v420, %v588
    %590 = vmatmul.f32.gmra.mxu0 %v314
    %v591 = vpop.f32.mrf.mxu0
    %v592 = vadd.f32 %v425, %v591
    %593 = vmatmul.f32.gmra.mxu0 %v316
    %v594 = vpop.f32.mrf.mxu0
    %v595 = vadd.f32 %v430, %v594
    %596 = vmatmul.f32.gmra.mxu0 %v318
    %v597 = vpop.f32.mrf.mxu0
    %v598 = vadd.f32 %v435, %v597
    %599 = vmatmul.f32.gmra.mxu0 %v320
    %v600 = vpop.f32.mrf.mxu0
    %v601 = vadd.f32 %v440, %v600
    %602 = vmatmul.f32.gmra.mxu0 %v322
    %v603 = vpop.f32.mrf.mxu0
    %v604 = vadd.f32 %v445, %v603
    %605 = vmatmul.f32.gmra.mxu0 %v324
    %v606 = vpop.f32.mrf.mxu0
    %v607 = vadd.f32 %v450, %v606
    %608 = vmatmul.f32.gmra.mxu0 %v326
    %v609 = vpop.f32.mrf.mxu0
    %v610 = vadd.f32 %v455, %v609
    %611 = vmatmul.f32.gmra.mxu0 %v328
    %v612 = vpop.f32.mrf.mxu0
    %v613 = vadd.f32 %v460, %v612
    %614 = vmatmul.f32.gmra.mxu0 %v330
    %v615 = vpop.f32.mrf.mxu0
    %v616 = vadd.f32 %v465, %v615
    %617 = vmatmul.f32.gmra.mxu0 %v332
    %v618 = vpop.f32.mrf.mxu0
    %v619 = vadd.f32 %v470, %v618
    %620 = vmatmul.f32.gmra.mxu0 %v334
    %v621 = vpop.f32.mrf.mxu0
    %v622 = vadd.f32 %v475, %v621
    %623 = vmatmul.f32.gmra.mxu0 %v336
    %v624 = vpop.f32.mrf.mxu0
    %v625 = vadd.f32 %v480, %v624
    %626 = vmatmul.f32.gmra.mxu0 %v338
    %v627 = vpop.f32.mrf.mxu0
    %v628 = vadd.f32 %v485, %v627
    %629 = vmatmul.f32.gmra.mxu0 %v340
    %v630 = vpop.f32.mrf.mxu0
    %v631 = vadd.f32 %v490, %v630
    %632 = vmatmul.f32.gmra.mxu0 %v342
    %v633 = vpop.f32.mrf.mxu0
    %v634 = vadd.f32 %v495, %v633
    %635 = vmatmul.f32.gmra.mxu0 %v344
    %v636 = vpop.f32.mrf.mxu0
    %v637 = vadd.f32 %v500, %v636
    %638 = vmatmul.f32.gmra.mxu0 %v346
    %v639 = vpop.f32.mrf.mxu0
    %v640 = vadd.f32 %v505, %v639
    %641 = vmatmul.f32.gmra.mxu0 %v348
    %v642 = vpop.f32.mrf.mxu0
    %v643 = vadd.f32 %v510, %v642
    %644 = vmatmul.f32.gmra.mxu0 %v350
    %v645 = vpop.f32.mrf.mxu0
    %v646 = vadd.f32 %v515, %v645
    %647 = vmatmul.f32.gmra.mxu0 %v352
    %v648 = vpop.f32.mrf.mxu0
    %v649 = vadd.f32 %v520, %v648
    %650 = vmatmul.f32.gmra.mxu0 %v354
    %v651 = vpop.f32.mrf.mxu0
    %v652 = vadd.f32 %v525, %v651
    %653 = vmatmul.f32.gmra.mxu0 %v356
    %v654 = vpop.f32.mrf.mxu0
    %v655 = vadd.f32 %v530, %v654
    %656 = vmatmul.f32.gmra.mxu0 %v358
    %v657 = vpop.f32.mrf.mxu0
    %v658 = vadd.f32 %v535, %v657
    %659 = vmatmul.f32.gmra.mxu0 %v360
    %v660 = vpop.f32.mrf.mxu0
    %v661 = vadd.f32 %v540, %v660
    %662 = vmatmul.f32.gmra.mxu0 %v362
    %v663 = vpop.f32.mrf.mxu0
    %v664 = vadd.f32 %v545, %v663
    %665 = vmatmul.f32.gmra.mxu0 %v364
    %v666 = vpop.f32.mrf.mxu0
    %v667 = vadd.f32 %v550, %v666
    %668 = vmatmul.f32.gmra.mxu0 %v366
    %v669 = vpop.f32.mrf.mxu0
    %v670 = vadd.f32 %v555, %v669
    %671 = vmatmul.f32.gmra.mxu0 %v368
    %v672 = vpop.f32.mrf.mxu0
    %v673 = vadd.f32 %v560, %v672
    %674 = vdwg.mxu0
    %675 = vmatpush.msra.mxu0 %v305
    %676 = vmatpush.msra.mxu0 %v304
    %677 = vmatpush.msra.mxu0 %v303
    %678 = vmatpush.msra.mxu0 %v302
    %679 = vmatpush.msra.mxu0 %v301
    %680 = vmatpush.msra.mxu0 %v300
    %681 = vmatpush.msra.mxu0 %v299
    %682 = vmatpush.msra.mxu0 %v298
    %683 = vmatpush.msra.mxu0 %v297
    %684 = vmatpush.msra.mxu0 %v296
    %685 = vmatpush.msra.mxu0 %v295
    %686 = vmatpush.msra.mxu0 %v294
    %687 = vmatpush.msra.mxu0 %v293
    %688 = vmatpush.msra.mxu0 %v292
    %689 = vmatpush.msra.mxu0 %v291
    %690 = vmatpush.msra.mxu0 %v290
    %691 = vmatmul.f32.gmra.mxu0 %v307
    %v692 = vpop.f32.mrf.mxu0
    %v693 = vadd.f32 %v580, %v692
    %694 = vmatmul.f32.gmra.mxu0 %v309
    %v695 = vpop.f32.mrf.mxu0
    %v696 = vadd.f32 %v583, %v695
    %697 = vmatmul.f32.gmra.mxu0 %v311
    %v698 = vpop.f32.mrf.mxu0
    %v699 = vadd.f32 %v586, %v698
    %700 = vmatmul.f32.gmra.mxu0 %v313
    %v701 = vpop.f32.mrf.mxu0
    %v702 = vadd.f32 %v589, %v701
    %703 = vmatmul.f32.gmra.mxu0 %v315
    %v704 = vpop.f32.mrf.mxu0
    %v705 = vadd.f32 %v592, %v704
    %706 = vmatmul.f32.gmra.mxu0 %v317
    %v707 = vpop.f32.mrf.mxu0
    %v708 = vadd.f32 %v595, %v707
    %709 = vmatmul.f32.gmra.mxu0 %v319
    %v710 = vpop.f32.mrf.mxu0
    %v711 = vadd.f32 %v598, %v710
    %712 = vmatmul.f32.gmra.mxu0 %v321
    %v713 = vpop.f32.mrf.mxu0
    %v714 = vadd.f32 %v601, %v713
    %715 = vmatmul.f32.gmra.mxu0 %v323
    %v716 = vpop.f32.mrf.mxu0
    %v717 = vadd.f32 %v604, %v716
    %718 = vmatmul.f32.gmra.mxu0 %v325
    %v719 = vpop.f32.mrf.mxu0
    %v720 = vadd.f32 %v607, %v719
    %721 = vmatmul.f32.gmra.mxu0 %v327
    %v722 = vpop.f32.mrf.mxu0
    %v723 = vadd.f32 %v610, %v722
    %724 = vmatmul.f32.gmra.mxu0 %v329
    %v725 = vpop.f32.mrf.mxu0
    %v726 = vadd.f32 %v613, %v725
    %727 = vmatmul.f32.gmra.mxu0 %v331
    %v728 = vpop.f32.mrf.mxu0
    %v729 = vadd.f32 %v616, %v728
    %730 = vmatmul.f32.gmra.mxu0 %v333
    %v731 = vpop.f32.mrf.mxu0
    %v732 = vadd.f32 %v619, %v731
    %733 = vmatmul.f32.gmra.mxu0 %v335
    %v734 = vpop.f32.mrf.mxu0
    %v735 = vadd.f32 %v622, %v734
    %736 = vmatmul.f32.gmra.mxu0 %v337
    %v737 = vpop.f32.mrf.mxu0
    %v738 = vadd.f32 %v625, %v737
    %739 = vmatmul.f32.gmra.mxu0 %v339
    %v740 = vpop.f32.mrf.mxu0
    %v741 = vadd.f32 %v628, %v740
    %742 = vmatmul.f32.gmra.mxu0 %v341
    %v743 = vpop.f32.mrf.mxu0
    %v744 = vadd.f32 %v631, %v743
    %745 = vmatmul.f32.gmra.mxu0 %v343
    %v746 = vpop.f32.mrf.mxu0
    %v747 = vadd.f32 %v634, %v746
    %748 = vmatmul.f32.gmra.mxu0 %v345
    %v749 = vpop.f32.mrf.mxu0
    %v750 = vadd.f32 %v637, %v749
    %751 = vmatmul.f32.gmra.mxu0 %v347
    %v752 = vpop.f32.mrf.mxu0
    %v753 = vadd.f32 %v640, %v752
    %754 = vmatmul.f32.gmra.mxu0 %v349
    %v755 = vpop.f32.mrf.mxu0
    %v756 = vadd.f32 %v643, %v755
    %757 = vmatmul.f32.gmra.mxu0 %v351
    %v758 = vpop.f32.mrf.mxu0
    %v759 = vadd.f32 %v646, %v758
    %760 = vmatmul.f32.gmra.mxu0 %v353
    %v761 = vpop.f32.mrf.mxu0
    %v762 = vadd.f32 %v649, %v761
    %763 = vmatmul.f32.gmra.mxu0 %v355
    %v764 = vpop.f32.mrf.mxu0
    %v765 = vadd.f32 %v652, %v764
    %766 = vmatmul.f32.gmra.mxu0 %v357
    %v767 = vpop.f32.mrf.mxu0
    %v768 = vadd.f32 %v655, %v767
    %769 = vmatmul.f32.gmra.mxu0 %v359
    %v770 = vpop.f32.mrf.mxu0
    %v771 = vadd.f32 %v658, %v770
    %772 = vmatmul.f32.gmra.mxu0 %v361
    %v773 = vpop.f32.mrf.mxu0
    %v774 = vadd.f32 %v661, %v773
    %775 = vmatmul.f32.gmra.mxu0 %v363
    %v776 = vpop.f32.mrf.mxu0
    %v777 = vadd.f32 %v664, %v776
    %778 = vmatmul.f32.gmra.mxu0 %v365
    %v779 = vpop.f32.mrf.mxu0
    %v780 = vadd.f32 %v667, %v779
    %781 = vmatmul.f32.gmra.mxu0 %v367
    %v782 = vpop.f32.mrf.mxu0
    %v783 = vadd.f32 %v670, %v782
    %784 = vmatmul.f32.gmra.mxu0 %v369
    %v785 = vpop.f32.mrf.mxu0
    %v786 = vadd.f32 %v673, %v785
    %787 = vdwg.mxu0
    %v788 = vmax.f32 %v693, 0.0
    %v789 = vmax.f32 %v696, 0.0
    %v790 = vmax.f32 %v699, 0.0
    %v791 = vmax.f32 %v702, 0.0
    %v792 = vmax.f32 %v705, 0.0
    %v793 = vmax.f32 %v708, 0.0
    %v794 = vmax.f32 %v711, 0.0
    %v795 = vmax.f32 %v714, 0.0
    %v796 = vmax.f32 %v717, 0.0
    %v797 = vmax.f32 %v720, 0.0
    %v798 = vmax.f32 %v723, 0.0
    %v799 = vmax.f32 %v726, 0.0
    %v800 = vmax.f32 %v729, 0.0
    %v801 = vmax.f32 %v732, 0.0
    %v802 = vmax.f32 %v735, 0.0
    %v803 = vmax.f32 %v738, 0.0
    %v804 = vmax.f32 %v741, 0.0
    %v805 = vmax.f32 %v744, 0.0
    %v806 = vmax.f32 %v747, 0.0
    %v807 = vmax.f32 %v750, 0.0
    %v808 = vmax.f32 %v753, 0.0
    %v809 = vmax.f32 %v756, 0.0
    %v810 = vmax.f32 %v759, 0.0
    %v811 = vmax.f32 %v762, 0.0
    %v812 = vmax.f32 %v765, 0.0
    %v813 = vmax.f32 %v768, 0.0
    %v814 = vmax.f32 %v771, 0.0
    %v815 = vmax.f32 %v774, 0.0
    %v816 = vmax.f32 %v777, 0.0
    %v817 = vmax.f32 %v780, 0.0
    %v818 = vmax.f32 %v783, 0.0
    %v819 = vmax.f32 %v786, 0.0
    %v820 = vld [vmem:[%s4] sm:$0x3]
    %v821 = vld [vmem:[#allocation2] sm:$0x1]
    %823 = vset.pattern.permute.xlu0 0
    %824 = vperm.xlu0 %823, %v821
    %v825 = vpop.permute.xlu0 %824
    %v827 = vperm.slane %v825, 0
    %v829 = vperm.slane %v820, 0
    %v830 = vperm.slane %v820, 1
    %833 = vmatpush.msra.mxu0 %v803
    %834 = vmatpush.msra.mxu0 %v802
    %835 = vmatpush.msra.mxu0 %v801
    %836 = vmatpush.msra.mxu0 %v800
    %837 = vmatpush.msra.mxu0 %v799
    %838 = vmatpush.msra.mxu0 %v798
    %839 = vmatpush.msra.mxu0 %v797
    %840 = vmatpush.msra.mxu0 %v796
    %841 = vmatpush.msra.mxu0 %v795
    %842 = vmatpush.msra.mxu0 %v794
    %843 = vmatpush.msra.mxu0 %v793
    %844 = vmatpush.msra.mxu0 %v792
    %845 = vmatpush.msra.mxu0 %v791
    %846 = vmatpush.msra.mxu0 %v790
    %847 = vmatpush.msra.mxu0 %v789
    %848 = vmatpush.msra.mxu0 %v788
    %849 = vmatmul.f32.gmra.mxu0 %v829
    %v850 = vpop.f32.mrf.mxu0
    %v851 = vadd.f32 %v827, %v850
    %852 = vdwg.mxu0
    %853 = vmatpush.msra.mxu0 %v819
    %854 = vmatpush.msra.mxu0 %v818
    %855 = vmatpush.msra.mxu0 %v817
    %856 = vmatpush.msra.mxu0 %v816
    %857 = vmatpush.msra.mxu0 %v815
    %858 = vmatpush.msra.mxu0 %v814
    %859 = vmatpush.msra.mxu0 %v813
    %860 = vmatpush.msra.mxu0 %v812
    %861 = vmatpush.msra.mxu0 %v811
    %862 = vmatpush.msra.mxu0 %v810
    %863 = vmatpush.msra.mxu0 %v809
    %864 = vmatpush.msra.mxu0 %v808
    %865 = vmatpush.msra.mxu0 %v807
    %866 = vmatpush.msra.mxu0 %v806
    %867 = vmatpush.msra.mxu0 %v805
    %868 = vmatpush.msra.mxu0 %v804
    %869 = vmatmul.f32.gmra.mxu0 %v830
    %v870 = vpop.f32.mrf.mxu0
    %v871 = vadd.f32 %v851, %v870
    %872 = vdwg.mxu0
    %vm873 = vcmask 57344
    %874 = vst.msk [vmem:[#allocation3] sm:$0x1] %vm873, %v871
    // Predicated region
    $region26: #{tpu_custom_call.1} parent=1 // pred_check
      _
    $region27: #{tpu_custom_call.1} parent=1 // pred_check_branch
      %876 = sbr.rel (0) target = $region29
    $region28: #{tpu_custom_call.1} parent=1 // pred_region
      %878 = vsyncadd [#allocation4], 0
      %s880 = sshll.u32 [#allocation3], 4
      %s881 = int_to_ptr.vmem [resolvable:$true] %s880
      %s882 = sshll.u32 %s6, 4
      %s883 = int_to_ptr.hbm [resolvable:$true] %s882
      %885 = dma.vmem_to_hbm [thread:$0]  %s881, 16, %s883, [#allocation4]
    $region29: #{tpu_custom_call.1} parent=1 // pred_fallthru
      _
    // Predicated region
    $region30: #{tpu_custom_call.1} parent=1 // pred_check
      _
    $region31: #{tpu_custom_call.1} parent=1 // pred_check_branch
      %887 = sbr.rel (0) target = $region33
    $region32: #{tpu_custom_call.1} parent=1 // pred_region
      %889 = dma.done [#allocation4], 16
    $region33: #{tpu_custom_call.1} parent=1 // pred_fallthru
      _
    %890 = vsyncpa [#allocation4], 1

// kernel: tpu_custom_call.1
$region0: #{tpu_custom_call.1}
  #allocation0 [shape = 'u32[]', space=smem, size = 0x4, offset = 0x4, fixed_abs, tag = 'smem constant byte address 0x4 - core index']
  #allocation1 [shape = 'u32[72,128]{1,0:T(1,128)}', space=vmem, size = 0x9000, scoped, tag = 'internal scratch']
  #allocation2 [shape = 'f32[1,1]{1,0:T(1,128)S(1)}', space=vmem, size = 0x200, scoped, tag = 'scoped memory for tpu_custom_call.1']
  %s0 = inlined_call_operand.vmem [shape: f32[9,8], index: 0, kind: input, shape index: {}]
  %s1 = inlined_call_operand.vmem [shape: f32[256,9], index: 1, kind: input, shape index: {}]
  %s2 = inlined_call_operand.vmem [shape: f32[256,256], index: 2, kind: input, shape index: {}]
  %s3 = inlined_call_operand.vmem [shape: f32[256,1], index: 3, kind: input, shape index: {}]
  %s4 = inlined_call_operand.vmem [shape: f32[1,256], index: 4, kind: input, shape index: {}]
  %s5 = inlined_call_operand.<no memory space> [shape: f32[1,1], index: 5, kind: input, shape index: {}]
  %s6 = inlined_call_operand.hbm [shape: f32[1,8], index: 6, kind: output, shape index: {}]
  %s7 = sld [smem:[#allocation0]]
  $region34: #{tpu_custom_call.1} parent=0
    _
  %s9 = ssub.s32 1, %s7
  %s10 = scalar_select 0, %s9, %s7
  %v11 = vstv %s5
  %12 = vst [vmem:[#allocation2] sm:$0x1] %v11
  $region1: #{tpu_custom_call.1} parent=0
    #allocation3 [shape = 'u8[512]{0}', space=vmem, size = 0x400, scoped, tag = 'output window, operand 0, single buffered']
    #allocation4 [shape = 's32[1]{0}', space=sflag, size = 0x4, scoped, tag = 'scoped memory for tpu_custom_call.1']
    %13 = vsyncpa [#allocation4], 0
    // Predicated region
    $region2: #{tpu_custom_call.1} parent=1 // pred_check
      _
    $region3: #{tpu_custom_call.1} parent=1 // pred_check_branch
      %15 = sbr.rel (0) target = $region5
    $region4: #{tpu_custom_call.1} parent=1 // pred_region
      _
    $region5: #{tpu_custom_call.1} parent=1 // pred_fallthru
      _
    // Predicated region
    $region6: #{tpu_custom_call.1} parent=1 // pred_check
      _
    $region7: #{tpu_custom_call.1} parent=1 // pred_check_branch
      %17 = sbr.rel (0) target = $region9
    $region8: #{tpu_custom_call.1} parent=1 // pred_region
      _
    $region9: #{tpu_custom_call.1} parent=1 // pred_fallthru
      _
    // Predicated region
    $region10: #{tpu_custom_call.1} parent=1 // pred_check
      _
    $region11: #{tpu_custom_call.1} parent=1 // pred_check_branch
      %19 = sbr.rel (0) target = $region13
    $region12: #{tpu_custom_call.1} parent=1 // pred_region
      _
    $region13: #{tpu_custom_call.1} parent=1 // pred_fallthru
      _
    // Predicated region
    $region14: #{tpu_custom_call.1} parent=1 // pred_check
      _
    $region15: #{tpu_custom_call.1} parent=1 // pred_check_branch
      %21 = sbr.rel (0) target = $region17
    $region16: #{tpu_custom_call.1} parent=1 // pred_region
      _
    $region17: #{tpu_custom_call.1} parent=1 // pred_fallthru
      _
    // Predicated region
    $region18: #{tpu_custom_call.1} parent=1 // pred_check
      _
    $region19: #{tpu_custom_call.1} parent=1 // pred_check_branch
      %23 = sbr.rel (0) target = $region21
    $region20: #{tpu_custom_call.1} parent=1 // pred_region
      _
    $region21: #{tpu_custom_call.1} parent=1 // pred_fallthru
      _
    // Predicated region
    $region22: #{tpu_custom_call.1} parent=1 // pred_check
      _
    $region23: #{tpu_custom_call.1} parent=1 // pred_check_branch
      %25 = sbr.rel (0) target = $region25
    $region24: #{tpu_custom_call.1} parent=1 // pred_region
      _
    $region25: #{tpu_custom_call.1} parent=1 // pred_fallthru
      _
    %v26 = vld [vmem:[%s1] sm:$0xff]
    %v27 = vld [vmem:[%s1 + $0x8] sm:$0xff]
    %v28 = vld [vmem:[%s1 + $0x10] sm:$0xff]
    %v29 = vld [vmem:[%s1 + $0x18] sm:$0xff]
    %v30 = vld [vmem:[%s1 + $0x20] sm:$0xff]
    %v31 = vld [vmem:[%s1 + $0x28] sm:$0xff]
    %v32 = vld [vmem:[%s1 + $0x30] sm:$0xff]
    %v33 = vld [vmem:[%s1 + $0x38] sm:$0xff]
    %v34 = vld [vmem:[%s1 + $0x40] sm:$0xff]
    %v35 = vld [vmem:[%s1 + $0x48] sm:$0xff]
    %v36 = vld [vmem:[%s1 + $0x50] sm:$0xff]
    %v37 = vld [vmem:[%s1 + $0x58] sm:$0xff]
    %v38 = vld [vmem:[%s1 + $0x60] sm:$0xff]
    %v39 = vld [vmem:[%s1 + $0x68] sm:$0xff]
    %v40 = vld [vmem:[%s1 + $0x70] sm:$0xff]
    %v41 = vld [vmem:[%s1 + $0x78] sm:$0xff]
    %v42 = vld [vmem:[%s1 + $0x80] sm:$0xff]
    %v43 = vld [vmem:[%s1 + $0x88] sm:$0xff]
    %v44 = vld [vmem:[%s1 + $0x90] sm:$0xff]
    %v45 = vld [vmem:[%s1 + $0x98] sm:$0xff]
    %v46 = vld [vmem:[%s1 + $0xa0] sm:$0xff]
    %v47 = vld [vmem:[%s1 + $0xa8] sm:$0xff]
    %v48 = vld [vmem:[%s1 + $0xb0] sm:$0xff]
    %v49 = vld [vmem:[%s1 + $0xb8] sm:$0xff]
    %v50 = vld [vmem:[%s1 + $0xc0] sm:$0xff]
    %v51 = vld [vmem:[%s1 + $0xc8] sm:$0xff]
    %v52 = vld [vmem:[%s1 + $0xd0] sm:$0xff]
    %v53 = vld [vmem:[%s1 + $0xd8] sm:$0xff]
    %v54 = vld [vmem:[%s1 + $0xe0] sm:$0xff]
    %v55 = vld [vmem:[%s1 + $0xe8] sm:$0xff]
    %v56 = vld [vmem:[%s1 + $0xf0] sm:$0xff]
    %v57 = vld [vmem:[%s1 + $0xf8] sm:$0xff]
    %v58 = vld [vmem:[%s0] sm:$0xff]
    %v59 = vld [vmem:[%s0 + $0x8] sm:$0x1]
    %vm60 = vcmask 72704
    %v62 = vsel %vm60, %v26, 0
    %v65 = vsel %vm60, %v27, 0
    %v68 = vsel %vm60, %v28, 0
    %v71 = vsel %vm60, %v29, 0
    %v74 = vsel %vm60, %v30, 0
    %v77 = vsel %vm60, %v31, 0
    %v80 = vsel %vm60, %v32, 0
    %v83 = vsel %vm60, %v33, 0
    %v86 = vsel %vm60, %v34, 0
    %v89 = vsel %vm60, %v35, 0
    %v92 = vsel %vm60, %v36, 0
    %v95 = vsel %vm60, %v37, 0
    %v98 = vsel %vm60, %v38, 0
    %v101 = vsel %vm60, %v39, 0
    %v104 = vsel %vm60, %v40, 0
    %v107 = vsel %vm60, %v41, 0
    %v110 = vsel %vm60, %v42, 0
    %v113 = vsel %vm60, %v43, 0
    %v116 = vsel %vm60, %v44, 0
    %v119 = vsel %vm60, %v45, 0
    %v122 = vsel %vm60, %v46, 0
    %v125 = vsel %vm60, %v47, 0
    %v128 = vsel %vm60, %v48, 0
    %v131 = vsel %vm60, %v49, 0
    %v134 = vsel %vm60, %v50, 0
    %v137 = vsel %vm60, %v51, 0
    %v140 = vsel %vm60, %v52, 0
    %v143 = vsel %vm60, %v53, 0
    %v146 = vsel %vm60, %v54, 0
    %v149 = vsel %vm60, %v55, 0
    %v152 = vsel %vm60, %v56, 0
    %v155 = vsel %vm60, %v57, 0
    %vm157 = vcmask 1040384
    %v159 = vsel %vm157, %v59, 0
    %161 = vmatpush.msra.mxu0 0.0
    %162 = vmatpush.msra.mxu0 0.0
    %163 = vmatpush.msra.mxu0 0.0
    %164 = vmatpush.msra.mxu0 0.0
    %165 = vmatpush.msra.mxu0 0.0
    %166 = vmatpush.msra.mxu0 0.0
    %167 = vmatpush.msra.mxu0 0.0
    %168 = vmatpush.msra.mxu0 0.0
    %169 = vmatpush.msra.mxu0 0.0
    %170 = vmatpush.msra.mxu0 0.0
    %171 = vmatpush.msra.mxu0 0.0
    %172 = vmatpush.msra.mxu0 0.0
    %173 = vmatpush.msra.mxu0 0.0
    %174 = vmatpush.msra.mxu0 0.0
    %175 = vmatpush.msra.mxu0 %v159
    %176 = vmatpush.msra.mxu0 %v58
    %177 = vmatmul.f32.gmra.mxu0 %v62
    %v178 = vpop.f32.mrf.mxu0
    %v179 = vadd.f32 0.0, %v178
    %180 = vmatmul.f32.gmra.mxu0 %v65
    %v181 = vpop.f32.mrf.mxu0
    %v182 = vadd.f32 0.0, %v181
    %183 = vmatmul.f32.gmra.mxu0 %v68
    %v184 = vpop.f32.mrf.mxu0
    %v185 = vadd.f32 0.0, %v184
    %186 = vmatmul.f32.gmra.mxu0 %v71
    %v187 = vpop.f32.mrf.mxu0
    %v188 = vadd.f32 0.0, %v187
    %189 = vmatmul.f32.gmra.mxu0 %v74
    %v190 = vpop.f32.mrf.mxu0
    %v191 = vadd.f32 0.0, %v190
    %192 = vmatmul.f32.gmra.mxu0 %v77
    %v193 = vpop.f32.mrf.mxu0
    %v194 = vadd.f32 0.0, %v193
    %195 = vmatmul.f32.gmra.mxu0 %v80
    %v196 = vpop.f32.mrf.mxu0
    %v197 = vadd.f32 0.0, %v196
    %198 = vmatmul.f32.gmra.mxu0 %v83
    %v199 = vpop.f32.mrf.mxu0
    %v200 = vadd.f32 0.0, %v199
    %201 = vmatmul.f32.gmra.mxu0 %v86
    %v202 = vpop.f32.mrf.mxu0
    %v203 = vadd.f32 0.0, %v202
    %204 = vmatmul.f32.gmra.mxu0 %v89
    %v205 = vpop.f32.mrf.mxu0
    %v206 = vadd.f32 0.0, %v205
    %207 = vmatmul.f32.gmra.mxu0 %v92
    %v208 = vpop.f32.mrf.mxu0
    %v209 = vadd.f32 0.0, %v208
    %210 = vmatmul.f32.gmra.mxu0 %v95
    %v211 = vpop.f32.mrf.mxu0
    %v212 = vadd.f32 0.0, %v211
    %213 = vmatmul.f32.gmra.mxu0 %v98
    %v214 = vpop.f32.mrf.mxu0
    %v215 = vadd.f32 0.0, %v214
    %216 = vmatmul.f32.gmra.mxu0 %v101
    %v217 = vpop.f32.mrf.mxu0
    %v218 = vadd.f32 0.0, %v217
    %219 = vmatmul.f32.gmra.mxu0 %v104
    %v220 = vpop.f32.mrf.mxu0
    %v221 = vadd.f32 0.0, %v220
    %222 = vmatmul.f32.gmra.mxu0 %v107
    %v223 = vpop.f32.mrf.mxu0
    %v224 = vadd.f32 0.0, %v223
    %225 = vmatmul.f32.gmra.mxu0 %v110
    %v226 = vpop.f32.mrf.mxu0
    %v227 = vadd.f32 0.0, %v226
    %228 = vmatmul.f32.gmra.mxu0 %v113
    %v229 = vpop.f32.mrf.mxu0
    %v230 = vadd.f32 0.0, %v229
    %231 = vmatmul.f32.gmra.mxu0 %v116
    %v232 = vpop.f32.mrf.mxu0
    %v233 = vadd.f32 0.0, %v232
    %234 = vmatmul.f32.gmra.mxu0 %v119
    %v235 = vpop.f32.mrf.mxu0
    %v236 = vadd.f32 0.0, %v235
    %237 = vmatmul.f32.gmra.mxu0 %v122
    %v238 = vpop.f32.mrf.mxu0
    %v239 = vadd.f32 0.0, %v238
    %240 = vmatmul.f32.gmra.mxu0 %v125
    %v241 = vpop.f32.mrf.mxu0
    %v242 = vadd.f32 0.0, %v241
    %243 = vmatmul.f32.gmra.mxu0 %v128
    %v244 = vpop.f32.mrf.mxu0
    %v245 = vadd.f32 0.0, %v244
    %246 = vmatmul.f32.gmra.mxu0 %v131
    %v247 = vpop.f32.mrf.mxu0
    %v248 = vadd.f32 0.0, %v247
    %249 = vmatmul.f32.gmra.mxu0 %v134
    %v250 = vpop.f32.mrf.mxu0
    %v251 = vadd.f32 0.0, %v250
    %252 = vmatmul.f32.gmra.mxu0 %v137
    %v253 = vpop.f32.mrf.mxu0
    %v254 = vadd.f32 0.0, %v253
    %255 = vmatmul.f32.gmra.mxu0 %v140
    %v256 = vpop.f32.mrf.mxu0
    %v257 = vadd.f32 0.0, %v256
    %258 = vmatmul.f32.gmra.mxu0 %v143
    %v259 = vpop.f32.mrf.mxu0
    %v260 = vadd.f32 0.0, %v259
    %261 = vmatmul.f32.gmra.mxu0 %v146
    %v262 = vpop.f32.mrf.mxu0
    %v263 = vadd.f32 0.0, %v262
    %264 = vmatmul.f32.gmra.mxu0 %v149
    %v265 = vpop.f32.mrf.mxu0
    %v266 = vadd.f32 0.0, %v265
    %267 = vmatmul.f32.gmra.mxu0 %v152
    %v268 = vpop.f32.mrf.mxu0
    %v269 = vadd.f32 0.0, %v268
    %270 = vmatmul.f32.gmra.mxu0 %v155
    %v271 = vpop.f32.mrf.mxu0
    %v272 = vadd.f32 0.0, %v271
    %273 = vdwg.mxu0
    %v274 = vmax.f32 %v179, 0.0
    %v275 = vmax.f32 %v182, 0.0
    %v276 = vmax.f32 %v185, 0.0
    %v277 = vmax.f32 %v188, 0.0
    %v278 = vmax.f32 %v191, 0.0
    %v279 = vmax.f32 %v194, 0.0
    %v280 = vmax.f32 %v197, 0.0
    %v281 = vmax.f32 %v200, 0.0
    %v282 = vmax.f32 %v203, 0.0
    %v283 = vmax.f32 %v206, 0.0
    %v284 = vmax.f32 %v209, 0.0
    %v285 = vmax.f32 %v212, 0.0
    %v286 = vmax.f32 %v215, 0.0
    %v287 = vmax.f32 %v218, 0.0
    %v288 = vmax.f32 %v221, 0.0
    %v289 = vmax.f32 %v224, 0.0
    %v290 = vmax.f32 %v227, 0.0
    %v291 = vmax.f32 %v230, 0.0
    %v292 = vmax.f32 %v233, 0.0
    %v293 = vmax.f32 %v236, 0.0
    %v294 = vmax.f32 %v239, 0.0
    %v295 = vmax.f32 %v242, 0.0
    %v296 = vmax.f32 %v245, 0.0
    %v297 = vmax.f32 %v248, 0.0
    %v298 = vmax.f32 %v251, 0.0
    %v299 = vmax.f32 %v254, 0.0
    %v300 = vmax.f32 %v257, 0.0
    %v301 = vmax.f32 %v260, 0.0
    %v302 = vmax.f32 %v263, 0.0
    %v303 = vmax.f32 %v266, 0.0
    %v304 = vmax.f32 %v269, 0.0
    %v305 = vmax.f32 %v272, 0.0
    %v306 = vld [vmem:[%s2] sm:$0xff]
    %v307 = vld [vmem:[%s2 + $0x8] sm:$0xff]
    %v308 = vld [vmem:[%s2 + $0x10] sm:$0xff]
    %v309 = vld [vmem:[%s2 + $0x18] sm:$0xff]
    %v310 = vld [vmem:[%s2 + $0x20] sm:$0xff]
    %v311 = vld [vmem:[%s2 + $0x28] sm:$0xff]
    %v312 = vld [vmem:[%s2 + $0x30] sm:$0xff]
    %v313 = vld [vmem:[%s2 + $0x38] sm:$0xff]
    %v314 = vld [vmem:[%s2 + $0x40] sm:$0xff]
    %v315 = vld [vmem:[%s2 + $0x48] sm:$0xff]
    %v316 = vld [vmem:[%s2 + $0x50] sm:$0xff]
    %v317 = vld [vmem:[%s2 + $0x58] sm:$0xff]
    %v318 = vld [vmem:[%s2 + $0x60] sm:$0xff]
    %v319 = vld [vmem:[%s2 + $0x68] sm:$0xff]
    %v320 = vld [vmem:[%s2 + $0x70] sm:$0xff]
    %v321 = vld [vmem:[%s2 + $0x78] sm:$0xff]
    %v322 = vld [vmem:[%s2 + $0x80] sm:$0xff]
    %v323 = vld [vmem:[%s2 + $0x88] sm:$0xff]
    %v324 = vld [vmem:[%s2 + $0x90] sm:$0xff]
    %v325 = vld [vmem:[%s2 + $0x98] sm:$0xff]
    %v326 = vld [vmem:[%s2 + $0xa0] sm:$0xff]
    %v327 = vld [vmem:[%s2 + $0xa8] sm:$0xff]
    %v328 = vld [vmem:[%s2 + $0xb0] sm:$0xff]
    %v329 = vld [vmem:[%s2 + $0xb8] sm:$0xff]
    %v330 = vld [vmem:[%s2 + $0xc0] sm:$0xff]
    %v331 = vld [vmem:[%s2 + $0xc8] sm:$0xff]
    %v332 = vld [vmem:[%s2 + $0xd0] sm:$0xff]
    %v333 = vld [vmem:[%s2 + $0xd8] sm:$0xff]
    %v334 = vld [vmem:[%s2 + $0xe0] sm:$0xff]
    %v335 = vld [vmem:[%s2 + $0xe8] sm:$0xff]
    %v336 = vld [vmem:[%s2 + $0xf0] sm:$0xff]
    %v337 = vld [vmem:[%s2 + $0xf8] sm:$0xff]
    %v338 = vld [vmem:[%s2 + $0x100] sm:$0xff]
    %v339 = vld [vmem:[%s2 + $0x108] sm:$0xff]
    %v340 = vld [vmem:[%s2 + $0x110] sm:$0xff]
    %v341 = vld [vmem:[%s2 + $0x118] sm:$0xff]
    %v342 = vld [vmem:[%s2 + $0x120] sm:$0xff]
    %v343 = vld [vmem:[%s2 + $0x128] sm:$0xff]
    %v344 = vld [vmem:[%s2 + $0x130] sm:$0xff]
    %v345 = vld [vmem:[%s2 + $0x138] sm:$0xff]
    %v346 = vld [vmem:[%s2 + $0x140] sm:$0xff]
    %v347 = vld [vmem:[%s2 + $0x148] sm:$0xff]
    %v348 = vld [vmem:[%s2 + $0x150] sm:$0xff]
    %v349 = vld [vmem:[%s2 + $0x158] sm:$0xff]
    %v350 = vld [vmem:[%s2 + $0x160] sm:$0xff]
    %v351 = vld [vmem:[%s2 + $0x168] sm:$0xff]
    %v352 = vld [vmem:[%s2 + $0x170] sm:$0xff]
    %v353 = vld [vmem:[%s2 + $0x178] sm:$0xff]
    %v354 = vld [vmem:[%s2 + $0x180] sm:$0xff]
    %v355 = vld [vmem:[%s2 + $0x188] sm:$0xff]
    %v356 = vld [vmem:[%s2 + $0x190] sm:$0xff]
    %v357 = vld [vmem:[%s2 + $0x198] sm:$0xff]
    %v358 = vld [vmem:[%s2 + $0x1a0] sm:$0xff]
    %v359 = vld [vmem:[%s2 + $0x1a8] sm:$0xff]
    %v360 = vld [vmem:[%s2 + $0x1b0] sm:$0xff]
    %v361 = vld [vmem:[%s2 + $0x1b8] sm:$0xff]
    %v362 = vld [vmem:[%s2 + $0x1c0] sm:$0xff]
    %v363 = vld [vmem:[%s2 + $0x1c8] sm:$0xff]
    %v364 = vld [vmem:[%s2 + $0x1d0] sm:$0xff]
    %v365 = vld [vmem:[%s2 + $0x1d8] sm:$0xff]
    %v366 = vld [vmem:[%s2 + $0x1e0] sm:$0xff]
    %v367 = vld [vmem:[%s2 + $0x1e8] sm:$0xff]
    %v368 = vld [vmem:[%s2 + $0x1f0] sm:$0xff]
    %v369 = vld [vmem:[%s2 + $0x1f8] sm:$0xff]
    %v370 = vld [vmem:[%s3] sm:$0xff]
    %v371 = vld [vmem:[%s3 + $0x8] sm:$0xff]
    %v372 = vld [vmem:[%s3 + $0x10] sm:$0xff]
    %v373 = vld [vmem:[%s3 + $0x18] sm:$0xff]
    %v374 = vld [vmem:[%s3 + $0x20] sm:$0xff]
    %v375 = vld [vmem:[%s3 + $0x28] sm:$0xff]
    %v376 = vld [vmem:[%s3 + $0x30] sm:$0xff]
    %v377 = vld [vmem:[%s3 + $0x38] sm:$0xff]
    %v378 = vld [vmem:[%s3 + $0x40] sm:$0xff]
    %v379 = vld [vmem:[%s3 + $0x48] sm:$0xff]
    %v380 = vld [vmem:[%s3 + $0x50] sm:$0xff]
    %v381 = vld [vmem:[%s3 + $0x58] sm:$0xff]
    %v382 = vld [vmem:[%s3 + $0x60] sm:$0xff]
    %v383 = vld [vmem:[%s3 + $0x68] sm:$0xff]
    %v384 = vld [vmem:[%s3 + $0x70] sm:$0xff]
    %v385 = vld [vmem:[%s3 + $0x78] sm:$0xff]
    %v386 = vld [vmem:[%s3 + $0x80] sm:$0xff]
    %v387 = vld [vmem:[%s3 + $0x88] sm:$0xff]
    %v388 = vld [vmem:[%s3 + $0x90] sm:$0xff]
    %v389 = vld [vmem:[%s3 + $0x98] sm:$0xff]
    %v390 = vld [vmem:[%s3 + $0xa0] sm:$0xff]
    %v391 = vld [vmem:[%s3 + $0xa8] sm:$0xff]
    %v392 = vld [vmem:[%s3 + $0xb0] sm:$0xff]
    %v393 = vld [vmem:[%s3 + $0xb8] sm:$0xff]
    %v394 = vld [vmem:[%s3 + $0xc0] sm:$0xff]
    %v395 = vld [vmem:[%s3 + $0xc8] sm:$0xff]
    %v396 = vld [vmem:[%s3 + $0xd0] sm:$0xff]
    %v397 = vld [vmem:[%s3 + $0xd8] sm:$0xff]
    %v398 = vld [vmem:[%s3 + $0xe0] sm:$0xff]
    %v399 = vld [vmem:[%s3 + $0xe8] sm:$0xff]
    %v400 = vld [vmem:[%s3 + $0xf0] sm:$0xff]
    %v401 = vld [vmem:[%s3 + $0xf8] sm:$0xff]
    %403 = vset.pattern.permute.xlu0 0
    %404 = vperm.xlu0 %403, %v370
    %v405 = vpop.permute.xlu0 %404
    %408 = vset.pattern.permute.xlu0 0
    %409 = vperm.xlu0 %408, %v371
    %v410 = vpop.permute.xlu0 %409
    %413 = vset.pattern.permute.xlu0 0
    %414 = vperm.xlu0 %413, %v372
    %v415 = vpop.permute.xlu0 %414
    %418 = vset.pattern.permute.xlu0 0
    %419 = vperm.xlu0 %418, %v373
    %v420 = vpop.permute.xlu0 %419
    %423 = vset.pattern.permute.xlu0 0
    %424 = vperm.xlu0 %423, %v374
    %v425 = vpop.permute.xlu0 %424
    %428 = vset.pattern.permute.xlu0 0
    %429 = vperm.xlu0 %428, %v375
    %v430 = vpop.permute.xlu0 %429
    %433 = vset.pattern.permute.xlu0 0
    %434 = vperm.xlu0 %433, %v376
    %v435 = vpop.permute.xlu0 %434
    %438 = vset.pattern.permute.xlu0 0
    %439 = vperm.xlu0 %438, %v377
    %v440 = vpop.permute.xlu0 %439
    %443 = vset.pattern.permute.xlu0 0
    %444 = vperm.xlu0 %443, %v378
    %v445 = vpop.permute.xlu0 %444
    %448 = vset.pattern.permute.xlu0 0
    %449 = vperm.xlu0 %448, %v379
    %v450 = vpop.permute.xlu0 %449
    %453 = vset.pattern.permute.xlu0 0
    %454 = vperm.xlu0 %453, %v380
    %v455 = vpop.permute.xlu0 %454
    %458 = vset.pattern.permute.xlu0 0
    %459 = vperm.xlu0 %458, %v381
    %v460 = vpop.permute.xlu0 %459
    %463 = vset.pattern.permute.xlu0 0
    %464 = vperm.xlu0 %463, %v382
    %v465 = vpop.permute.xlu0 %464
    %468 = vset.pattern.permute.xlu0 0
    %469 = vperm.xlu0 %468, %v383
    %v470 = vpop.permute.xlu0 %469
    %473 = vset.pattern.permute.xlu0 0
    %474 = vperm.xlu0 %473, %v384
    %v475 = vpop.permute.xlu0 %474
    %478 = vset.pattern.permute.xlu0 0
    %479 = vperm.xlu0 %478, %v385
    %v480 = vpop.permute.xlu0 %479
    %483 = vset.pattern.permute.xlu0 0
    %484 = vperm.xlu0 %483, %v386
    %v485 = vpop.permute.xlu0 %484
    %488 = vset.pattern.permute.xlu0 0
    %489 = vperm.xlu0 %488, %v387
    %v490 = vpop.permute.xlu0 %489
    %493 = vset.pattern.permute.xlu0 0
    %494 = vperm.xlu0 %493, %v388
    %v495 = vpop.permute.xlu0 %494
    %498 = vset.pattern.permute.xlu0 0
    %499 = vperm.xlu0 %498, %v389
    %v500 = vpop.permute.xlu0 %499
    %503 = vset.pattern.permute.xlu0 0
    %504 = vperm.xlu0 %503, %v390
    %v505 = vpop.permute.xlu0 %504
    %508 = vset.pattern.permute.xlu0 0
    %509 = vperm.xlu0 %508, %v391
    %v510 = vpop.permute.xlu0 %509
    %513 = vset.pattern.permute.xlu0 0
    %514 = vperm.xlu0 %513, %v392
    %v515 = vpop.permute.xlu0 %514
    %518 = vset.pattern.permute.xlu0 0
    %519 = vperm.xlu0 %518, %v393
    %v520 = vpop.permute.xlu0 %519
    %523 = vset.pattern.permute.xlu0 0
    %524 = vperm.xlu0 %523, %v394
    %v525 = vpop.permute.xlu0 %524
    %528 = vset.pattern.permute.xlu0 0
    %529 = vperm.xlu0 %528, %v395
    %v530 = vpop.permute.xlu0 %529
    %533 = vset.pattern.permute.xlu0 0
    %534 = vperm.xlu0 %533, %v396
    %v535 = vpop.permute.xlu0 %534
    %538 = vset.pattern.permute.xlu0 0
    %539 = vperm.xlu0 %538, %v397
    %v540 = vpop.permute.xlu0 %539
    %543 = vset.pattern.permute.xlu0 0
    %544 = vperm.xlu0 %543, %v398
    %v545 = vpop.permute.xlu0 %544
    %548 = vset.pattern.permute.xlu0 0
    %549 = vperm.xlu0 %548, %v399
    %v550 = vpop.permute.xlu0 %549
    %553 = vset.pattern.permute.xlu0 0
    %554 = vperm.xlu0 %553, %v400
    %v555 = vpop.permute.xlu0 %554
    %558 = vset.pattern.permute.xlu0 0
    %559 = vperm.xlu0 %558, %v401
    %v560 = vpop.permute.xlu0 %559
    %562 = vmatpush.msra.mxu0 %v289
    %563 = vmatpush.msra.mxu0 %v288
    %564 = vmatpush.msra.mxu0 %v287
    %565 = vmatpush.msra.mxu0 %v286
    %566 = vmatpush.msra.mxu0 %v285
    %567 = vmatpush.msra.mxu0 %v284
    %568 = vmatpush.msra.mxu0 %v283
    %569 = vmatpush.msra.mxu0 %v282
    %570 = vmatpush.msra.mxu0 %v281
    %571 = vmatpush.msra.mxu0 %v280
    %572 = vmatpush.msra.mxu0 %v279
    %573 = vmatpush.msra.mxu0 %v278
    %574 = vmatpush.msra.mxu0 %v277
    %575 = vmatpush.msra.mxu0 %v276
    %576 = vmatpush.msra.mxu0 %v275
    %577 = vmatpush.msra.mxu0 %v274
    %578 = vmatmul.f32.gmra.mxu0 %v306
    %v579 = vpop.f32.mrf.mxu0
    %v580 = vadd.f32 %v405, %v579
    %581 = vmatmul.f32.gmra.mxu0 %v308
    %v582 = vpop.f32.mrf.mxu0
    %v583 = vadd.f32 %v410, %v582
    %584 = vmatmul.f32.gmra.mxu0 %v310
    %v585 = vpop.f32.mrf.mxu0
    %v586 = vadd.f32 %v415, %v585
    %587 = vmatmul.f32.gmra.mxu0 %v312
    %v588 = vpop.f32.mrf.mxu0
    %v589 = vadd.f32 %v420, %v588
    %590 = vmatmul.f32.gmra.mxu0 %v314
    %v591 = vpop.f32.mrf.mxu0
    %v592 = vadd.f32 %v425, %v591
    %593 = vmatmul.f32.gmra.mxu0 %v316
    %v594 = vpop.f32.mrf.mxu0
    %v595 = vadd.f32 %v430, %v594
    %596 = vmatmul.f32.gmra.mxu0 %v318
    %v597 = vpop.f32.mrf.mxu0
    %v598 = vadd.f32 %v435, %v597
    %599 = vmatmul.f32.gmra.mxu0 %v320
    %v600 = vpop.f32.mrf.mxu0
    %v601 = vadd.f32 %v440, %v600
    %602 = vmatmul.f32.gmra.mxu0 %v322
    %v603 = vpop.f32.mrf.mxu0
    %v604 = vadd.f32 %v445, %v603
    %605 = vmatmul.f32.gmra.mxu0 %v324
    %v606 = vpop.f32.mrf.mxu0
    %v607 = vadd.f32 %v450, %v606
    %608 = vmatmul.f32.gmra.mxu0 %v326
    %v609 = vpop.f32.mrf.mxu0
    %v610 = vadd.f32 %v455, %v609
    %611 = vmatmul.f32.gmra.mxu0 %v328
    %v612 = vpop.f32.mrf.mxu0
    %v613 = vadd.f32 %v460, %v612
    %614 = vmatmul.f32.gmra.mxu0 %v330
    %v615 = vpop.f32.mrf.mxu0
    %v616 = vadd.f32 %v465, %v615
    %617 = vmatmul.f32.gmra.mxu0 %v332
    %v618 = vpop.f32.mrf.mxu0
    %v619 = vadd.f32 %v470, %v618
    %620 = vmatmul.f32.gmra.mxu0 %v334
    %v621 = vpop.f32.mrf.mxu0
    %v622 = vadd.f32 %v475, %v621
    %623 = vmatmul.f32.gmra.mxu0 %v336
    %v624 = vpop.f32.mrf.mxu0
    %v625 = vadd.f32 %v480, %v624
    %626 = vmatmul.f32.gmra.mxu0 %v338
    %v627 = vpop.f32.mrf.mxu0
    %v628 = vadd.f32 %v485, %v627
    %629 = vmatmul.f32.gmra.mxu0 %v340
    %v630 = vpop.f32.mrf.mxu0
    %v631 = vadd.f32 %v490, %v630
    %632 = vmatmul.f32.gmra.mxu0 %v342
    %v633 = vpop.f32.mrf.mxu0
    %v634 = vadd.f32 %v495, %v633
    %635 = vmatmul.f32.gmra.mxu0 %v344
    %v636 = vpop.f32.mrf.mxu0
    %v637 = vadd.f32 %v500, %v636
    %638 = vmatmul.f32.gmra.mxu0 %v346
    %v639 = vpop.f32.mrf.mxu0
    %v640 = vadd.f32 %v505, %v639
    %641 = vmatmul.f32.gmra.mxu0 %v348
    %v642 = vpop.f32.mrf.mxu0
    %v643 = vadd.f32 %v510, %v642
    %644 = vmatmul.f32.gmra.mxu0 %v350
    %v645 = vpop.f32.mrf.mxu0
    %v646 = vadd.f32 %v515, %v645
    %647 = vmatmul.f32.gmra.mxu0 %v352
    %v648 = vpop.f32.mrf.mxu0
    %v649 = vadd.f32 %v520, %v648
    %650 = vmatmul.f32.gmra.mxu0 %v354
    %v651 = vpop.f32.mrf.mxu0
    %v652 = vadd.f32 %v525, %v651
    %653 = vmatmul.f32.gmra.mxu0 %v356
    %v654 = vpop.f32.mrf.mxu0
    %v655 = vadd.f32 %v530, %v654
    %656 = vmatmul.f32.gmra.mxu0 %v358
    %v657 = vpop.f32.mrf.mxu0
    %v658 = vadd.f32 %v535, %v657
    %659 = vmatmul.f32.gmra.mxu0 %v360
    %v660 = vpop.f32.mrf.mxu0
    %v661 = vadd.f32 %v540, %v660
    %662 = vmatmul.f32.gmra.mxu0 %v362
    %v663 = vpop.f32.mrf.mxu0
    %v664 = vadd.f32 %v545, %v663
    %665 = vmatmul.f32.gmra.mxu0 %v364
    %v666 = vpop.f32.mrf.mxu0
    %v667 = vadd.f32 %v550, %v666
    %668 = vmatmul.f32.gmra.mxu0 %v366
    %v669 = vpop.f32.mrf.mxu0
    %v670 = vadd.f32 %v555, %v669
    %671 = vmatmul.f32.gmra.mxu0 %v368
    %v672 = vpop.f32.mrf.mxu0
    %v673 = vadd.f32 %v560, %v672
    %674 = vdwg.mxu0
    %675 = vmatpush.msra.mxu0 %v305
    %676 = vmatpush.msra.mxu0 %v304
    %677 = vmatpush.msra.mxu0 %v303
    %678 = vmatpush.msra.mxu0 %v302
    %679 = vmatpush.msra.mxu0 %v301
    %680 = vmatpush.msra.mxu0 %v300
    %681 = vmatpush.msra.mxu0 %v299
    %682 = vmatpush.msra.mxu0 %v298
    %683 = vmatpush.msra.mxu0 %v297
    %684 = vmatpush.msra.mxu0 %v296
    %685 = vmatpush.msra.mxu0 %v295
    %686 = vmatpush.msra.mxu0 %v294
    %687 = vmatpush.msra.mxu0 %v293
    %688 = vmatpush.msra.mxu0 %v292
    %689 = vmatpush.msra.mxu0 %v291
    %690 = vmatpush.msra.mxu0 %v290
    %691 = vmatmul.f32.gmra.mxu0 %v307
    %v692 = vpop.f32.mrf.mxu0
    %v693 = vadd.f32 %v580, %v692
    %694 = vmatmul.f32.gmra.mxu0 %v309
    %v695 = vpop.f32.mrf.mxu0
    %v696 = vadd.f32 %v583, %v695
    %697 = vmatmul.f32.gmra.mxu0 %v311
    %v698 = vpop.f32.mrf.mxu0
    %v699 = vadd.f32 %v586, %v698
    %700 = vmatmul.f32.gmra.mxu0 %v313
    %v701 = vpop.f32.mrf.mxu0
    %v702 = vadd.f32 %v589, %v701
    %703 = vmatmul.f32.gmra.mxu0 %v315
    %v704 = vpop.f32.mrf.mxu0
    %v705 = vadd.f32 %v592, %v704
    %706 = vmatmul.f32.gmra.mxu0 %v317
    %v707 = vpop.f32.mrf.mxu0
    %v708 = vadd.f32 %v595, %v707
    %709 = vmatmul.f32.gmra.mxu0 %v319
    %v710 = vpop.f32.mrf.mxu0
    %v711 = vadd.f32 %v598, %v710
    %712 = vmatmul.f32.gmra.mxu0 %v321
    %v713 = vpop.f32.mrf.mxu0
    %v714 = vadd.f32 %v601, %v713
    %715 = vmatmul.f32.gmra.mxu0 %v323
    %v716 = vpop.f32.mrf.mxu0
    %v717 = vadd.f32 %v604, %v716
    %718 = vmatmul.f32.gmra.mxu0 %v325
    %v719 = vpop.f32.mrf.mxu0
    %v720 = vadd.f32 %v607, %v719
    %721 = vmatmul.f32.gmra.mxu0 %v327
    %v722 = vpop.f32.mrf.mxu0
    %v723 = vadd.f32 %v610, %v722
    %724 = vmatmul.f32.gmra.mxu0 %v329
    %v725 = vpop.f32.mrf.mxu0
    %v726 = vadd.f32 %v613, %v725
    %727 = vmatmul.f32.gmra.mxu0 %v331
    %v728 = vpop.f32.mrf.mxu0
    %v729 = vadd.f32 %v616, %v728
    %730 = vmatmul.f32.gmra.mxu0 %v333
    %v731 = vpop.f32.mrf.mxu0
    %v732 = vadd.f32 %v619, %v731
    %733 = vmatmul.f32.gmra.mxu0 %v335
    %v734 = vpop.f32.mrf.mxu0
    %v735 = vadd.f32 %v622, %v734
    %736 = vmatmul.f32.gmra.mxu0 %v337
    %v737 = vpop.f32.mrf.mxu0
    %v738 = vadd.f32 %v625, %v737
    %739 = vmatmul.f32.gmra.mxu0 %v339
    %v740 = vpop.f32.mrf.mxu0
    %v741 = vadd.f32 %v628, %v740
    %742 = vmatmul.f32.gmra.mxu0 %v341
    %v743 = vpop.f32.mrf.mxu0
    %v744 = vadd.f32 %v631, %v743
    %745 = vmatmul.f32.gmra.mxu0 %v343
    %v746 = vpop.f32.mrf.mxu0
    %v747 = vadd.f32 %v634, %v746
    %748 = vmatmul.f32.gmra.mxu0 %v345
    %v749 = vpop.f32.mrf.mxu0
    %v750 = vadd.f32 %v637, %v749
    %751 = vmatmul.f32.gmra.mxu0 %v347
    %v752 = vpop.f32.mrf.mxu0
    %v753 = vadd.f32 %v640, %v752
    %754 = vmatmul.f32.gmra.mxu0 %v349
    %v755 = vpop.f32.mrf.mxu0
    %v756 = vadd.f32 %v643, %v755
    %757 = vmatmul.f32.gmra.mxu0 %v351
    %v758 = vpop.f32.mrf.mxu0
    %v759 = vadd.f32 %v646, %v758
    %760 = vmatmul.f32.gmra.mxu0 %v353
    %v761 = vpop.f32.mrf.mxu0
    %v762 = vadd.f32 %v649, %v761
    %763 = vmatmul.f32.gmra.mxu0 %v355
    %v764 = vpop.f32.mrf.mxu0
    %v765 = vadd.f32 %v652, %v764
    %766 = vmatmul.f32.gmra.mxu0 %v357
    %v767 = vpop.f32.mrf.mxu0
    %v768 = vadd.f32 %v655, %v767
    %769 = vmatmul.f32.gmra.mxu0 %v359
    %v770 = vpop.f32.mrf.mxu0
    %v771 = vadd.f32 %v658, %v770
    %772 = vmatmul.f32.gmra.mxu0 %v361
    %v773 = vpop.f32.mrf.mxu0
    %v774 = vadd.f32 %v661, %v773
    %775 = vmatmul.f32.gmra.mxu0 %v363
    %v776 = vpop.f32.mrf.mxu0
    %v777 = vadd.f32 %v664, %v776
    %778 = vmatmul.f32.gmra.mxu0 %v365
    %v779 = vpop.f32.mrf.mxu0
    %v780 = vadd.f32 %v667, %v779
    %781 = vmatmul.f32.gmra.mxu0 %v367
    %v782 = vpop.f32.mrf.mxu0
    %v783 = vadd.f32 %v670, %v782
    %784 = vmatmul.f32.gmra.mxu0 %v369
    %v785 = vpop.f32.mrf.mxu0
    %v786 = vadd.f32 %v673, %v785
    %787 = vdwg.mxu0
    %v788 = vmax.f32 %v693, 0.0
    %v789 = vmax.f32 %v696, 0.0
    %v790 = vmax.f32 %v699, 0.0
    %v791 = vmax.f32 %v702, 0.0
    %v792 = vmax.f32 %v705, 0.0
    %v793 = vmax.f32 %v708, 0.0
    %v794 = vmax.f32 %v711, 0.0
    %v795 = vmax.f32 %v714, 0.0
    %v796 = vmax.f32 %v717, 0.0
    %v797 = vmax.f32 %v720, 0.0
    %v798 = vmax.f32 %v723, 0.0
    %v799 = vmax.f32 %v726, 0.0
    %v800 = vmax.f32 %v729, 0.0
    %v801 = vmax.f32 %v732, 0.0
    %v802 = vmax.f32 %v735, 0.0
    %v803 = vmax.f32 %v738, 0.0
    %v804 = vmax.f32 %v741, 0.0
    %v805 = vmax.f32 %v744, 0.0
    %v806 = vmax.f32 %v747, 0.0
    %v807 = vmax.f32 %v750, 0.0
    %v808 = vmax.f32 %v753, 0.0
    %v809 = vmax.f32 %v756, 0.0
    %v810 = vmax.f32 %v759, 0.0
    %v811 = vmax.f32 %v762, 0.0
    %v812 = vmax.f32 %v765, 0.0
    %v813 = vmax.f32 %v768, 0.0
    %v814 = vmax.f32 %v771, 0.0
    %v815 = vmax.f32 %v774, 0.0
    %v816 = vmax.f32 %v777, 0.0
    %v817 = vmax.f32 %v780, 0.0
    %v818 = vmax.f32 %v783, 0.0
    %v819 = vmax.f32 %v786, 0.0
    %v820 = vld [vmem:[%s4] sm:$0x3]
    %v821 = vld [vmem:[#allocation2] sm:$0x1]
    %823 = vset.pattern.permute.xlu0 0
    %824 = vperm.xlu0 %823, %v821
    %v825 = vpop.permute.xlu0 %824
    %v827 = vperm.slane %v825, 0
    %v829 = vperm.slane %v820, 0
    %v830 = vperm.slane %v820, 1
    %833 = vmatpush.msra.mxu0 %v803
    %834 = vmatpush.msra.mxu0 %v802
    %835 = vmatpush.msra.mxu0 %v801
    %836 = vmatpush.msra.mxu0 %v800
    %837 = vmatpush.msra.mxu0 %v799
    %838 = vmatpush.msra.mxu0 %v798
    %839 = vmatpush.msra.mxu0 %v797
    %840 = vmatpush.msra.mxu0 %v796
    %841 = vmatpush.msra.mxu0 %v795
    %842 = vmatpush.msra.mxu0 %v794
    %843 = vmatpush.msra.mxu0 %v793
    %844 = vmatpush.msra.mxu0 %v792
    %845 = vmatpush.msra.mxu0 %v791
    %846 = vmatpush.msra.mxu0 %v790
    %847 = vmatpush.msra.mxu0 %v789
    %848 = vmatpush.msra.mxu0 %v788
    %849 = vmatmul.f32.gmra.mxu0 %v829
    %v850 = vpop.f32.mrf.mxu0
    %v851 = vadd.f32 %v827, %v850
    %852 = vdwg.mxu0
    %853 = vmatpush.msra.mxu0 %v819
    %854 = vmatpush.msra.mxu0 %v818
    %855 = vmatpush.msra.mxu0 %v817
    %856 = vmatpush.msra.mxu0 %v816
    %857 = vmatpush.msra.mxu0 %v815
    %858 = vmatpush.msra.mxu0 %v814
    %859 = vmatpush.msra.mxu0 %v813
    %860 = vmatpush.msra.mxu0 %v812
    %861 = vmatpush.msra.mxu0 %v811
    %862 = vmatpush.msra.mxu0 %v810
    %863 = vmatpush.msra.mxu0 %v809
    %864 = vmatpush.msra.mxu0 %v808
    %865 = vmatpush.msra.mxu0 %v807
    %866 = vmatpush.msra.mxu0 %v806
    %867 = vmatpush.msra.mxu0 %v805
    %868 = vmatpush.msra.mxu0 %v804
    %869 = vmatmul.f32.gmra.mxu0 %v830
    %v870 = vpop.f32.mrf.mxu0
    %v871 = vadd.f32 %v851, %v870
    %872 = vdwg.mxu0
    %vm873 = vcmask 57344
    %874 = vst.msk [vmem:[#allocation3] sm:$0x1] %vm873, %v871
    // Predicated region
    $region26: #{tpu_custom_call.1} parent=1 // pred_check
      _
    $region27: #{tpu_custom_call.1} parent=1 // pred_check_branch
      %876 = sbr.rel (0) target = $region29
    $region28: #{tpu_custom_call.1} parent=1 // pred_region
      %878 = vsyncadd [#allocation4], 0
      %s880 = sshll.u32 [#allocation3], 4
      %s881 = int_to_ptr.vmem [resolvable:$true] %s880
      %s882 = sshll.u32 %s6, 4
      %s883 = int_to_ptr.hbm [resolvable:$true] %s882
      %885 = dma.vmem_to_hbm [thread:$0]  %s881, 16, %s883, [#allocation4]
    $region29: #{tpu_custom_call.1} parent=1 // pred_fallthru
      _
    // Predicated region
    $region30: #{tpu_custom_call.1} parent=1 // pred_check
      _
    $region31: #{tpu_custom_call.1} parent=1 // pred_check_branch
      %887 = sbr.rel (0) target = $region33
    $region32: #{tpu_custom_call.1} parent=1 // pred_region
      %889 = dma.done [#allocation4], 16
    $region33: #{tpu_custom_call.1} parent=1 // pred_fallthru
      _
    %890 = vsyncpa [#allocation4], 1

</llo_original>
